<compile_context>
chip_gen: v7x
topology: tpu7x:2x2x1
jax: 0.10.0
libtpu: 0.0.40
codegen_flags: <defaults>
</compile_context>

<pallas_src>
import jax
import jax.numpy as jnp
from jax import lax
from jax.experimental import pallas as pl
from jax.experimental.pallas import tpu as pltpu
import numpy as np


# ----------------------------- Pallas kernel ------------------------------- #

def _make_encoder_kernel(T, B, E, H, D):
    H2 = 2 * H      # combined (fwd|bwd) gate width
    H6 = 6 * H

    def kernel(x2_ref, w2_ref, b2_ref, whh_ref, bhhn_ref, wfc_ref, bfc_ref,
               out_ref, hid_ref,
               gi_ref, out_f_ref, out_b_ref):
        # ---- one MXU matmul for both directions' input projections --------
        # x2: (T*B, 2E) = [x(t) | x(T-1-t)],  w2: (2E, 6H) block structured.
        # Resulting row block t holds, pre-interleaved by gate:
        #   [r_f(t) r_b(T-1-t) | z_f(t) z_b(T-1-t) | n_f(t) n_b(T-1-t)]
        gi_ref[...] = (jnp.dot(x2_ref[...], w2_ref[...],
                               preferred_element_type=jnp.float32)
                       + b2_ref[...])                                 # (T*B, 6H)

        whh = whh_ref[...]        # (2H, 6H) block-diagonal recurrent weights
        bhhn = bhhn_ref[...]      # (1, 2H)  [b_hh_n fwd | b_hh_n bwd]

        # ---- serialized recurrence: one combined h @ W_hh per step --------
        def step(t, hc):
            gi_t = gi_ref[pl.ds(t * B, B), :]                         # (B, 6H)
            gh = jnp.dot(hc, whh, preferred_element_type=jnp.float32)  # (B, 6H)
            r = jax.nn.sigmoid(gi_t[:, 0:H2] + gh[:, 0:H2])
            z = jax.nn.sigmoid(gi_t[:, H2:2 * H2] + gh[:, H2:2 * H2])
            n = jnp.tanh(gi_t[:, 2 * H2:3 * H2]
                         + r * (gh[:, 2 * H2:3 * H2] + bhhn))
            hc = (1.0 - z) * n + z * hc                               # (B, 2H)
            # forward half belongs to time t, backward half to time T-1-t.
            out_f_ref[t] = hc[:, :H]
            out_b_ref[T - 1 - t] = hc[:, H:]
            return hc

        hc0 = jnp.zeros((B, H2), jnp.float32)
        hc = lax.fori_loop(0, T, step, hc0, unroll=True)

        # ---- fused fwd/bwd output: single (T, B, 2H) store -----------------
        out_ref[...] = jnp.concatenate(
            [out_f_ref[...], out_b_ref[...]], axis=-1).astype(out_ref.dtype)

        # ---- final FC: hc == cat(h_fwd_final, h_bwd_final) already --------
        hid = jnp.tanh(
            jnp.dot(hc, wfc_ref[...], preferred_element_type=jnp.float32)
            + bfc_ref[...])
        hid_ref[...] = hid.astype(hid_ref.dtype)

    return kernel


def encoder_pallas(x2, p, T, B, E, H, D):
    """x2: (T*B, 2E) float32 = [embedded | time-reversed embedded]."""
    kernel = _make_encoder_kernel(T, B, E, H, D)
    vmem = lambda: pl.BlockSpec(memory_space=pltpu.MemorySpace.VMEM)

    out, hidden = pl.pallas_call(
        kernel,
        out_shape=(
            jax.ShapeDtypeStruct((T, B, 2 * H), jnp.float32),
            jax.ShapeDtypeStruct((B, D), jnp.float32),
        ),
        in_specs=[vmem() for _ in range(7)],
        out_specs=(vmem(), vmem()),
        scratch_shapes=[
            pltpu.VMEM((T * B, 6 * H), jnp.float32),   # combined input projections
            pltpu.VMEM((T, B, H), jnp.float32),        # fwd outputs (time order)
            pltpu.VMEM((T, B, H), jnp.float32),        # bwd outputs (time order)
        ],
    )(x2, p["w2"], p["b2"], p["whh"], p["bhhn"], p["wfc"], p["bfc"])
    return out, hidden


# ----------------------------- Glue / wrapper ------------------------------ #

def init_params(key, vocab, E, H, D):
    ks = jax.random.split(key, 12)
    s_gru = 1.0 / np.sqrt(H)
    s_fc = 1.0 / np.sqrt(2 * H)
    u = lambda k, shape, s: jax.random.uniform(k, shape, jnp.float32, -s, s)
    return {
        "emb":   jax.random.normal(ks[0], (vocab, E), jnp.float32),
        # stored transposed vs PyTorch: (in_features, 3H), column order r|z|n
        "wih_f": u(ks[1], (E, 3 * H), s_gru),
        "whh_f": u(ks[2], (H, 3 * H), s_gru),
        "bih_f": u(ks[3], (1, 3 * H), s_gru),
        "bhh_f": u(ks[4], (1, 3 * H), s_gru),
        "wih_b": u(ks[5], (E, 3 * H), s_gru),
        "whh_b": u(ks[6], (H, 3 * H), s_gru),
        "bih_b": u(ks[7], (1, 3 * H), s_gru),
        "bhh_b": u(ks[8], (1, 3 * H), s_gru),
        "wfc":   u(ks[9], (2 * H, D), s_fc),
        "bfc":   u(ks[10], (1, D), s_fc),
    }


def pack_params(params, E, H):
    """One-time (XLA) repack: interleave gates by direction, fold biases,
    build block-structured input/recurrent weights."""
    H2 = 2 * H
    zE = jnp.zeros((E, H), jnp.float32)
    zH = jnp.zeros((H, H), jnp.float32)

    wf, wb = params["wih_f"], params["wih_b"]
    # rows 0:E multiply x(t); rows E:2E multiply x(T-1-t).  Column blocks:
    # [r_f r_b z_f z_b n_f n_b], each H wide.
    w2 = jnp.concatenate([
        jnp.concatenate([wf[:, :H], zE, wf[:, H:H2], zE, wf[:, H2:], zE], axis=1),
        jnp.concatenate([zE, wb[:, :H], zE, wb[:, H:H2], zE, wb[:, H2:]], axis=1),
    ], axis=0)                                                        # (2E, 6H)

    uf, ub = params["whh_f"], params["whh_b"]
    whh = jnp.concatenate([
        jnp.concatenate([uf[:, :H], zH, uf[:, H:H2], zH, uf[:, H2:], zH], axis=1),
        jnp.concatenate([zH, ub[:, :H], zH, ub[:, H:H2], zH, ub[:, H2:]], axis=1),
    ], axis=0)                                                        # (2H, 6H)

    bif, bib = params["bih_f"], params["bih_b"]
    bhf, bhb = params["bhh_f"], params["bhh_b"]
    b2 = jnp.concatenate([
        bif[:, :H] + bhf[:, :H],   bib[:, :H] + bhb[:, :H],           # r (folded)
        bif[:, H:H2] + bhf[:, H:H2], bib[:, H:H2] + bhb[:, H:H2],     # z (folded)
        bif[:, H2:],               bib[:, H2:],                       # n (input bias only)
    ], axis=1)                                                        # (1, 6H)

    bhhn = jnp.concatenate([bhf[:, H2:], bhb[:, H2:]], axis=1)        # (1, 2H)

    return {"w2": w2, "b2": b2, "whh": whh, "bhhn": bhhn,
            "wfc": params["wfc"], "bfc": params["bfc"]}


def encoder_forward(src, params, T, B, E, H, D):
    # Embedding lookup (gather) and dropout (identity / eval) stay in plain JAX.
    emb = jnp.take(params["emb"], src.reshape(-1), axis=0)            # (T*B, E)
    emb_rev = jnp.flip(emb.reshape(T, B, E), axis=0).reshape(T * B, E)
    x2 = jnp.concatenate([emb, emb_rev], axis=1)                      # (T*B, 2E)
    packed = pack_params(params, E, H)
    return encoder_pallas(x2, packed, T, B, E, H, D)


# ----------------------------- Pure-JAX reference -------------------------- #

def _gru_cell_ref(x, h_prev, wih, whh, bih, bhh, H):
    gi = jnp.dot(x, wih) + bih
    gh = jnp.dot(h_prev, whh) + bhh
    r = jax.nn.sigmoid(gi[:, 0 * H:1 * H] + gh[:, 0 * H:1 * H])
    z = jax.nn.sigmoid(gi[:, 1 * H:2 * H] + gh[:, 1 * H:2 * H])
    n = jnp.tanh(gi[:, 2 * H:3 * H] + r * gh[:, 2 * H:3 * H])
    return (1.0 - z) * n + z * h_prev


def encoder_reference(src, params, T, B, E, H, D):
    x = jnp.take(params["emb"], src, axis=0)          # (T, B, E)

    def scan_dir(xs, wih, whh, bih, bhh):
        def step(h, xt):
            h_new = _gru_cell_ref(xt, h, wih, whh, bih, bhh, H)
            return h_new, h_new
        h0 = jnp.zeros((B, H), jnp.float32)
        _, ys = lax.scan(step, h0, xs)
        return ys

    out_f = scan_dir(x, params["wih_f"], params["whh_f"],
                     params["bih_f"], params["bhh_f"])
    out_b_rev = scan_dir(x[::-1], params["wih_b"], params["whh_b"],
                         params["bih_b"], params["bhh_b"])
    out_b = out_b_rev[::-1]
    outputs = jnp.concatenate([out_f, out_b], axis=-1)
    hcat = jnp.concatenate([out_f[-1], out_b_rev[-1]], axis=1)
    hidden = jnp.tanh(hcat @ params["wfc"] + params["bfc"])
    return outputs, hidden


# ----------------------------------- main ----------------------------------- #

if __name__ == "__main__":
    VOCAB, E, H, D = 50, 32, 32, 32     # input_dim, emb_dim, enc_hid_dim, dec_hid_dim
    T, B = 8, 4                          # seq_len, batch

    key = jax.random.PRNGKey(0)
    pkey, skey = jax.random.split(key)
    params = init_params(pkey, VOCAB, E, H, D)
    src = jax.random.randint(skey, (T, B), 0, VOCAB, dtype=jnp.int32)

    outputs, hidden = encoder_forward(src, params, T, B, E, H, D)
    jax.block_until_ready((outputs, hidden))

    out_ref, hid_ref = encoder_reference(src, params, T, B, E, H, D)
    np.testing.assert_allclose(np.asarray(outputs), np.asarray(out_ref),
                               rtol=1e-5, atol=1e-5)
    np.testing.assert_allclose(np.asarray(hidden), np.asarray(hid_ref),
                               rtol=1e-5, atol=1e-5)

    print("KERNEL_OK")
</pallas_src>

<mosaic_0001>
module attributes {stable_mosaic.version = 11 : i64} {
  func.func @kernel(%arg0: memref<32x64xf32, #tpu.memory_space<vmem>>, %arg1: memref<64x192xf32, #tpu.memory_space<vmem>>, %arg2: memref<1x192xf32, #tpu.memory_space<vmem>>, %arg3: memref<64x192xf32, #tpu.memory_space<vmem>>, %arg4: memref<1x64xf32, #tpu.memory_space<vmem>>, %arg5: memref<64x32xf32, #tpu.memory_space<vmem>>, %arg6: memref<1x32xf32, #tpu.memory_space<vmem>>, %arg7: memref<8x4x64xf32, #tpu.memory_space<vmem>>, %arg8: memref<4x32xf32, #tpu.memory_space<vmem>>, %arg9: memref<32x192xf32, #tpu.memory_space<vmem>>, %arg10: memref<8x4x32xf32, #tpu.memory_space<vmem>>, %arg11: memref<8x4x32xf32, #tpu.memory_space<vmem>>) attributes {dimension_semantics = [], scalar_prefetch = 0 : i64, scratch_operands = 3 : i64, tpu.core_type = #tpu.core_type<tc>} {
    %c0 = arith.constant 0 : index
    %c0_0 = arith.constant 0 : index
    %0 = vector.load %arg0[%c0, %c0_0] : memref<32x64xf32, #tpu.memory_space<vmem>>, vector<32x64xf32>
    %c0_1 = arith.constant 0 : index
    %c0_2 = arith.constant 0 : index
    %1 = vector.load %arg1[%c0_1, %c0_2] : memref<64x192xf32, #tpu.memory_space<vmem>>, vector<64x192xf32>
    %cst = arith.constant dense<0.000000e+00> : vector<32x192xf32>
    %2 = tpu.matmul %0, %1, %cst {dimension_numbers = #tpu.dot_dimension_numbers<[1], [0], [0], [1], [0, 0, 1, 1], [], []>} : vector<32x64xf32>, vector<64x192xf32>, vector<32x192xf32> -> vector<32x192xf32>
    %c0_3 = arith.constant 0 : index
    %c0_4 = arith.constant 0 : index
    %3 = vector.load %arg2[%c0_3, %c0_4] : memref<1x192xf32, #tpu.memory_space<vmem>>, vector<1x192xf32>
    %4 = vector.broadcast %3 : vector<1x192xf32> to vector<32x192xf32>
    %5 = arith.addf %2, %4 : vector<32x192xf32>
    %c0_5 = arith.constant 0 : index
    %c0_6 = arith.constant 0 : index
    %6 = vector.load %arg9[%c0_5, %c0_6] : memref<32x192xf32, #tpu.memory_space<vmem>>, vector<32x192xf32>
    tpu.vector_store %arg9[%c0_5, %c0_6], %5 {strides = array<i32>} : memref<32x192xf32, #tpu.memory_space<vmem>>, vector<32x192xf32>,
    %c0_7 = arith.constant 0 : index
    %c0_8 = arith.constant 0 : index
    %7 = vector.load %arg3[%c0_7, %c0_8] : memref<64x192xf32, #tpu.memory_space<vmem>>, vector<64x192xf32>
    %c0_9 = arith.constant 0 : index
    %c0_10 = arith.constant 0 : index
    %8 = vector.load %arg4[%c0_9, %c0_10] : memref<1x64xf32, #tpu.memory_space<vmem>>, vector<1x64xf32>
    %cst_11 = arith.constant 0.000000e+00 : f32
    %9 = vector.broadcast %cst_11 : f32 to vector<4x64xf32>
    %c0_i32 = arith.constant 0 : i32
    %c4_i32 = arith.constant 4 : i32
    %10 = arith.muli %c0_i32, %c4_i32 : i32
    %11 = arith.index_cast %10 : i32 to index
    %c0_12 = arith.constant 0 : index
    %12 = vector.load %arg9[%11, %c0_12] : memref<32x192xf32, #tpu.memory_space<vmem>>, vector<4x192xf32>
    %cst_13 = arith.constant dense<0.000000e+00> : vector<4x192xf32>
    %13 = tpu.matmul %9, %7, %cst_13 {dimension_numbers = #tpu.dot_dimension_numbers<[1], [0], [0], [1], [0, 0, 1, 1], [], []>} : vector<4x64xf32>, vector<64x192xf32>, vector<4x192xf32> -> vector<4x192xf32>
    %14 = vector.extract_strided_slice %12 {offsets = [0, 0], sizes = [4, 64], strides = [1, 1]} : vector<4x192xf32> to vector<4x64xf32>
    %15 = vector.extract_strided_slice %13 {offsets = [0, 0], sizes = [4, 64], strides = [1, 1]} : vector<4x192xf32> to vector<4x64xf32>
    %16 = arith.addf %14, %15 : vector<4x64xf32>
    %17 = arith.negf %16 : vector<4x64xf32>
    %18 = math.exp %17 : vector<4x64xf32>
    %cst_14 = arith.constant 1.000000e+00 : f32
    %19 = vector.broadcast %cst_14 : f32 to vector<4x64xf32>
    %20 = arith.addf %19, %18 : vector<4x64xf32>
    %21 = arith.divf %19, %20 : vector<4x64xf32>
    %22 = vector.extract_strided_slice %12 {offsets = [0, 64], sizes = [4, 64], strides = [1, 1]} : vector<4x192xf32> to vector<4x64xf32>
    %23 = vector.extract_strided_slice %13 {offsets = [0, 64], sizes = [4, 64], strides = [1, 1]} : vector<4x192xf32> to vector<4x64xf32>
    %24 = arith.addf %22, %23 : vector<4x64xf32>
    %25 = arith.negf %24 : vector<4x64xf32>
    %26 = math.exp %25 : vector<4x64xf32>
    %cst_15 = arith.constant 1.000000e+00 : f32
    %27 = vector.broadcast %cst_15 : f32 to vector<4x64xf32>
    %28 = arith.addf %27, %26 : vector<4x64xf32>
    %29 = arith.divf %27, %28 : vector<4x64xf32>
    %30 = vector.extract_strided_slice %12 {offsets = [0, 128], sizes = [4, 64], strides = [1, 1]} : vector<4x192xf32> to vector<4x64xf32>
    %31 = vector.extract_strided_slice %13 {offsets = [0, 128], sizes = [4, 64], strides = [1, 1]} : vector<4x192xf32> to vector<4x64xf32>
    %32 = vector.broadcast %8 : vector<1x64xf32> to vector<4x64xf32>
    %33 = arith.addf %31, %32 : vector<4x64xf32>
    %34 = arith.mulf %21, %33 : vector<4x64xf32>
    %35 = arith.addf %30, %34 : vector<4x64xf32>
    %36 = math.tanh %35 : vector<4x64xf32>
    %cst_16 = arith.constant 1.000000e+00 : f32
    %37 = vector.broadcast %cst_16 : f32 to vector<4x64xf32>
    %38 = arith.subf %37, %29 : vector<4x64xf32>
    %39 = arith.mulf %38, %36 : vector<4x64xf32>
    %40 = arith.mulf %29, %9 : vector<4x64xf32>
    %41 = arith.addf %39, %40 : vector<4x64xf32>
    %42 = vector.extract_strided_slice %41 {offsets = [0, 0], sizes = [4, 32], strides = [1, 1]} : vector<4x64xf32> to vector<4x32xf32>
    %43 = arith.index_cast %c0_i32 : i32 to index
    %c0_17 = arith.constant 0 : index
    %c0_18 = arith.constant 0 : index
    %44 = vector.load %arg10[%43, %c0_17, %c0_18] : memref<8x4x32xf32, #tpu.memory_space<vmem>>, vector<1x4x32xf32>
    %45 = vector.shape_cast %44 : vector<1x4x32xf32> to vector<4x32xf32>
    %46 = vector.shape_cast %42 : vector<4x32xf32> to vector<1x4x32xf32>
    tpu.vector_store %arg10[%43, %c0_17, %c0_18], %46 {strides = array<i32>} : memref<8x4x32xf32, #tpu.memory_space<vmem>>, vector<1x4x32xf32>,
    %47 = vector.extract_strided_slice %41 {offsets = [0, 32], sizes = [4, 32], strides = [1, 1]} : vector<4x64xf32> to vector<4x32xf32>
    %c7_i32 = arith.constant 7 : i32
    %48 = arith.subi %c7_i32, %c0_i32 : i32
    %49 = arith.index_cast %48 : i32 to index
    %c0_19 = arith.constant 0 : index
    %c0_20 = arith.constant 0 : index
    %50 = vector.load %arg11[%49, %c0_19, %c0_20] : memref<8x4x32xf32, #tpu.memory_space<vmem>>, vector<1x4x32xf32>
    %51 = vector.shape_cast %50 : vector<1x4x32xf32> to vector<4x32xf32>
    %52 = vector.shape_cast %47 : vector<4x32xf32> to vector<1x4x32xf32>
    tpu.vector_store %arg11[%49, %c0_19, %c0_20], %52 {strides = array<i32>} : memref<8x4x32xf32, #tpu.memory_space<vmem>>, vector<1x4x32xf32>,
    %c1_i32 = arith.constant 1 : i32
    %c4_i32_21 = arith.constant 4 : i32
    %53 = arith.muli %c1_i32, %c4_i32_21 : i32
    %54 = arith.index_cast %53 : i32 to index
    %c0_22 = arith.constant 0 : index
    %55 = vector.load %arg9[%54, %c0_22] : memref<32x192xf32, #tpu.memory_space<vmem>>, vector<4x192xf32>
    %cst_23 = arith.constant dense<0.000000e+00> : vector<4x192xf32>
    %56 = tpu.matmul %41, %7, %cst_23 {dimension_numbers = #tpu.dot_dimension_numbers<[1], [0], [0], [1], [0, 0, 1, 1], [], []>} : vector<4x64xf32>, vector<64x192xf32>, vector<4x192xf32> -> vector<4x192xf32>
    %57 = vector.extract_strided_slice %55 {offsets = [0, 0], sizes = [4, 64], strides = [1, 1]} : vector<4x192xf32> to vector<4x64xf32>
    %58 = vector.extract_strided_slice %56 {offsets = [0, 0], sizes = [4, 64], strides = [1, 1]} : vector<4x192xf32> to vector<4x64xf32>
    %59 = arith.addf %57, %58 : vector<4x64xf32>
    %60 = arith.negf %59 : vector<4x64xf32>
    %61 = math.exp %60 : vector<4x64xf32>
    %cst_24 = arith.constant 1.000000e+00 : f32
    %62 = vector.broadcast %cst_24 : f32 to vector<4x64xf32>
    %63 = arith.addf %62, %61 : vector<4x64xf32>
    %64 = arith.divf %62, %63 : vector<4x64xf32>
    %65 = vector.extract_strided_slice %55 {offsets = [0, 64], sizes = [4, 64], strides = [1, 1]} : vector<4x192xf32> to vector<4x64xf32>
    %66 = vector.extract_strided_slice %56 {offsets = [0, 64], sizes = [4, 64], strides = [1, 1]} : vector<4x192xf32> to vector<4x64xf32>
    %67 = arith.addf %65, %66 : vector<4x64xf32>
    %68 = arith.negf %67 : vector<4x64xf32>
    %69 = math.exp %68 : vector<4x64xf32>
    %cst_25 = arith.constant 1.000000e+00 : f32
    %70 = vector.broadcast %cst_25 : f32 to vector<4x64xf32>
    %71 = arith.addf %70, %69 : vector<4x64xf32>
    %72 = arith.divf %70, %71 : vector<4x64xf32>
    %73 = vector.extract_strided_slice %55 {offsets = [0, 128], sizes = [4, 64], strides = [1, 1]} : vector<4x192xf32> to vector<4x64xf32>
    %74 = vector.extract_strided_slice %56 {offsets = [0, 128], sizes = [4, 64], strides = [1, 1]} : vector<4x192xf32> to vector<4x64xf32>
    %75 = vector.broadcast %8 : vector<1x64xf32> to vector<4x64xf32>
    %76 = arith.addf %74, %75 : vector<4x64xf32>
    %77 = arith.mulf %64, %76 : vector<4x64xf32>
    %78 = arith.addf %73, %77 : vector<4x64xf32>
    %79 = math.tanh %78 : vector<4x64xf32>
    %cst_26 = arith.constant 1.000000e+00 : f32
    %80 = vector.broadcast %cst_26 : f32 to vector<4x64xf32>
    %81 = arith.subf %80, %72 : vector<4x64xf32>
    %82 = arith.mulf %81, %79 : vector<4x64xf32>
    %83 = arith.mulf %72, %41 : vector<4x64xf32>
    %84 = arith.addf %82, %83 : vector<4x64xf32>
    %85 = vector.extract_strided_slice %84 {offsets = [0, 0], sizes = [4, 32], strides = [1, 1]} : vector<4x64xf32> to vector<4x32xf32>
    %86 = arith.index_cast %c1_i32 : i32 to index
    %c0_27 = arith.constant 0 : index
    %c0_28 = arith.constant 0 : index
    %87 = vector.load %arg10[%86, %c0_27, %c0_28] : memref<8x4x32xf32, #tpu.memory_space<vmem>>, vector<1x4x32xf32>
    %88 = vector.shape_cast %87 : vector<1x4x32xf32> to vector<4x32xf32>
    %89 = vector.shape_cast %85 : vector<4x32xf32> to vector<1x4x32xf32>
    tpu.vector_store %arg10[%86, %c0_27, %c0_28], %89 {strides = array<i32>} : memref<8x4x32xf32, #tpu.memory_space<vmem>>, vector<1x4x32xf32>,
    %90 = vector.extract_strided_slice %84 {offsets = [0, 32], sizes = [4, 32], strides = [1, 1]} : vector<4x64xf32> to vector<4x32xf32>
    %c7_i32_29 = arith.constant 7 : i32
    %91 = arith.subi %c7_i32_29, %c1_i32 : i32
    %92 = arith.index_cast %91 : i32 to index
    %c0_30 = arith.constant 0 : index
    %c0_31 = arith.constant 0 : index
    %93 = vector.load %arg11[%92, %c0_30, %c0_31] : memref<8x4x32xf32, #tpu.memory_space<vmem>>, vector<1x4x32xf32>
    %94 = vector.shape_cast %93 : vector<1x4x32xf32> to vector<4x32xf32>
    %95 = vector.shape_cast %90 : vector<4x32xf32> to vector<1x4x32xf32>
    tpu.vector_store %arg11[%92, %c0_30, %c0_31], %95 {strides = array<i32>} : memref<8x4x32xf32, #tpu.memory_space<vmem>>, vector<1x4x32xf32>,
    %c2_i32 = arith.constant 2 : i32
    %c4_i32_32 = arith.constant 4 : i32
    %96 = arith.muli %c2_i32, %c4_i32_32 : i32
    %97 = arith.index_cast %96 : i32 to index
    %c0_33 = arith.constant 0 : index
    %98 = vector.load %arg9[%97, %c0_33] : memref<32x192xf32, #tpu.memory_space<vmem>>, vector<4x192xf32>
    %cst_34 = arith.constant dense<0.000000e+00> : vector<4x192xf32>
    %99 = tpu.matmul %84, %7, %cst_34 {dimension_numbers = #tpu.dot_dimension_numbers<[1], [0], [0], [1], [0, 0, 1, 1], [], []>} : vector<4x64xf32>, vector<64x192xf32>, vector<4x192xf32> -> vector<4x192xf32>
    %100 = vector.extract_strided_slice %98 {offsets = [0, 0], sizes = [4, 64], strides = [1, 1]} : vector<4x192xf32> to vector<4x64xf32>
    %101 = vector.extract_strided_slice %99 {offsets = [0, 0], sizes = [4, 64], strides = [1, 1]} : vector<4x192xf32> to vector<4x64xf32>
    %102 = arith.addf %100, %101 : vector<4x64xf32>
    %103 = arith.negf %102 : vector<4x64xf32>
    %104 = math.exp %103 : vector<4x64xf32>
    %cst_35 = arith.constant 1.000000e+00 : f32
    %105 = vector.broadcast %cst_35 : f32 to vector<4x64xf32>
    %106 = arith.addf %105, %104 : vector<4x64xf32>
    %107 = arith.divf %105, %106 : vector<4x64xf32>
    %108 = vector.extract_strided_slice %98 {offsets = [0, 64], sizes = [4, 64], strides = [1, 1]} : vector<4x192xf32> to vector<4x64xf32>
    %109 = vector.extract_strided_slice %99 {offsets = [0, 64], sizes = [4, 64], strides = [1, 1]} : vector<4x192xf32> to vector<4x64xf32>
    %110 = arith.addf %108, %109 : vector<4x64xf32>
    %111 = arith.negf %110 : vector<4x64xf32>
    %112 = math.exp %111 : vector<4x64xf32>
    %cst_36 = arith.constant 1.000000e+00 : f32
    %113 = vector.broadcast %cst_36 : f32 to vector<4x64xf32>
    %114 = arith.addf %113, %112 : vector<4x64xf32>
    %115 = arith.divf %113, %114 : vector<4x64xf32>
    %116 = vector.extract_strided_slice %98 {offsets = [0, 128], sizes = [4, 64], strides = [1, 1]} : vector<4x192xf32> to vector<4x64xf32>
    %117 = vector.extract_strided_slice %99 {offsets = [0, 128], sizes = [4, 64], strides = [1, 1]} : vector<4x192xf32> to vector<4x64xf32>
    %118 = vector.broadcast %8 : vector<1x64xf32> to vector<4x64xf32>
    %119 = arith.addf %117, %118 : vector<4x64xf32>
    %120 = arith.mulf %107, %119 : vector<4x64xf32>
    %121 = arith.addf %116, %120 : vector<4x64xf32>
    %122 = math.tanh %121 : vector<4x64xf32>
    %cst_37 = arith.constant 1.000000e+00 : f32
    %123 = vector.broadcast %cst_37 : f32 to vector<4x64xf32>
    %124 = arith.subf %123, %115 : vector<4x64xf32>
    %125 = arith.mulf %124, %122 : vector<4x64xf32>
    %126 = arith.mulf %115, %84 : vector<4x64xf32>
    %127 = arith.addf %125, %126 : vector<4x64xf32>
    %128 = vector.extract_strided_slice %127 {offsets = [0, 0], sizes = [4, 32], strides = [1, 1]} : vector<4x64xf32> to vector<4x32xf32>
    %129 = arith.index_cast %c2_i32 : i32 to index
    %c0_38 = arith.constant 0 : index
    %c0_39 = arith.constant 0 : index
    %130 = vector.load %arg10[%129, %c0_38, %c0_39] : memref<8x4x32xf32, #tpu.memory_space<vmem>>, vector<1x4x32xf32>
    %131 = vector.shape_cast %130 : vector<1x4x32xf32> to vector<4x32xf32>
    %132 = vector.shape_cast %128 : vector<4x32xf32> to vector<1x4x32xf32>
    tpu.vector_store %arg10[%129, %c0_38, %c0_39], %132 {strides = array<i32>} : memref<8x4x32xf32, #tpu.memory_space<vmem>>, vector<1x4x32xf32>,
    %133 = vector.extract_strided_slice %127 {offsets = [0, 32], sizes = [4, 32], strides = [1, 1]} : vector<4x64xf32> to vector<4x32xf32>
    %c7_i32_40 = arith.constant 7 : i32
    %134 = arith.subi %c7_i32_40, %c2_i32 : i32
    %135 = arith.index_cast %134 : i32 to index
    %c0_41 = arith.constant 0 : index
    %c0_42 = arith.constant 0 : index
    %136 = vector.load %arg11[%135, %c0_41, %c0_42] : memref<8x4x32xf32, #tpu.memory_space<vmem>>, vector<1x4x32xf32>
    %137 = vector.shape_cast %136 : vector<1x4x32xf32> to vector<4x32xf32>
    %138 = vector.shape_cast %133 : vector<4x32xf32> to vector<1x4x32xf32>
    tpu.vector_store %arg11[%135, %c0_41, %c0_42], %138 {strides = array<i32>} : memref<8x4x32xf32, #tpu.memory_space<vmem>>, vector<1x4x32xf32>,
    %c3_i32 = arith.constant 3 : i32
    %c4_i32_43 = arith.constant 4 : i32
    %139 = arith.muli %c3_i32, %c4_i32_43 : i32
    %140 = arith.index_cast %139 : i32 to index
    %c0_44 = arith.constant 0 : index
    %141 = vector.load %arg9[%140, %c0_44] : memref<32x192xf32, #tpu.memory_space<vmem>>, vector<4x192xf32>
    %cst_45 = arith.constant dense<0.000000e+00> : vector<4x192xf32>
    %142 = tpu.matmul %127, %7, %cst_45 {dimension_numbers = #tpu.dot_dimension_numbers<[1], [0], [0], [1], [0, 0, 1, 1], [], []>} : vector<4x64xf32>, vector<64x192xf32>, vector<4x192xf32> -> vector<4x192xf32>
    %143 = vector.extract_strided_slice %141 {offsets = [0, 0], sizes = [4, 64], strides = [1, 1]} : vector<4x192xf32> to vector<4x64xf32>
    %144 = vector.extract_strided_slice %142 {offsets = [0, 0], sizes = [4, 64], strides = [1, 1]} : vector<4x192xf32> to vector<4x64xf32>
    %145 = arith.addf %143, %144 : vector<4x64xf32>
    %146 = arith.negf %145 : vector<4x64xf32>
    %147 = math.exp %146 : vector<4x64xf32>
    %cst_46 = arith.constant 1.000000e+00 : f32
    %148 = vector.broadcast %cst_46 : f32 to vector<4x64xf32>
    %149 = arith.addf %148, %147 : vector<4x64xf32>
    %150 = arith.divf %148, %149 : vector<4x64xf32>
    %151 = vector.extract_strided_slice %141 {offsets = [0, 64], sizes = [4, 64], strides = [1, 1]} : vector<4x192xf32> to vector<4x64xf32>
    %152 = vector.extract_strided_slice %142 {offsets = [0, 64], sizes = [4, 64], strides = [1, 1]} : vector<4x192xf32> to vector<4x64xf32>
    %153 = arith.addf %151, %152 : vector<4x64xf32>
    %154 = arith.negf %153 : vector<4x64xf32>
    %155 = math.exp %154 : vector<4x64xf32>
    %cst_47 = arith.constant 1.000000e+00 : f32
    %156 = vector.broadcast %cst_47 : f32 to vector<4x64xf32>
    %157 = arith.addf %156, %155 : vector<4x64xf32>
    %158 = arith.divf %156, %157 : vector<4x64xf32>
    %159 = vector.extract_strided_slice %141 {offsets = [0, 128], sizes = [4, 64], strides = [1, 1]} : vector<4x192xf32> to vector<4x64xf32>
    %160 = vector.extract_strided_slice %142 {offsets = [0, 128], sizes = [4, 64], strides = [1, 1]} : vector<4x192xf32> to vector<4x64xf32>
    %161 = vector.broadcast %8 : vector<1x64xf32> to vector<4x64xf32>
    %162 = arith.addf %160, %161 : vector<4x64xf32>
    %163 = arith.mulf %150, %162 : vector<4x64xf32>
    %164 = arith.addf %159, %163 : vector<4x64xf32>
    %165 = math.tanh %164 : vector<4x64xf32>
    %cst_48 = arith.constant 1.000000e+00 : f32
    %166 = vector.broadcast %cst_48 : f32 to vector<4x64xf32>
    %167 = arith.subf %166, %158 : vector<4x64xf32>
    %168 = arith.mulf %167, %165 : vector<4x64xf32>
    %169 = arith.mulf %158, %127 : vector<4x64xf32>
    %170 = arith.addf %168, %169 : vector<4x64xf32>
    %171 = vector.extract_strided_slice %170 {offsets = [0, 0], sizes = [4, 32], strides = [1, 1]} : vector<4x64xf32> to vector<4x32xf32>
    %172 = arith.index_cast %c3_i32 : i32 to index
    %c0_49 = arith.constant 0 : index
    %c0_50 = arith.constant 0 : index
    %173 = vector.load %arg10[%172, %c0_49, %c0_50] : memref<8x4x32xf32, #tpu.memory_space<vmem>>, vector<1x4x32xf32>
    %174 = vector.shape_cast %173 : vector<1x4x32xf32> to vector<4x32xf32>
    %175 = vector.shape_cast %171 : vector<4x32xf32> to vector<1x4x32xf32>
    tpu.vector_store %arg10[%172, %c0_49, %c0_50], %175 {strides = array<i32>} : memref<8x4x32xf32, #tpu.memory_space<vmem>>, vector<1x4x32xf32>,
    %176 = vector.extract_strided_slice %170 {offsets = [0, 32], sizes = [4, 32], strides = [1, 1]} : vector<4x64xf32> to vector<4x32xf32>
    %c7_i32_51 = arith.constant 7 : i32
    %177 = arith.subi %c7_i32_51, %c3_i32 : i32
    %178 = arith.index_cast %177 : i32 to index
    %c0_52 = arith.constant 0 : index
    %c0_53 = arith.constant 0 : index
    %179 = vector.load %arg11[%178, %c0_52, %c0_53] : memref<8x4x32xf32, #tpu.memory_space<vmem>>, vector<1x4x32xf32>
    %180 = vector.shape_cast %179 : vector<1x4x32xf32> to vector<4x32xf32>
    %181 = vector.shape_cast %176 : vector<4x32xf32> to vector<1x4x32xf32>
    tpu.vector_store %arg11[%178, %c0_52, %c0_53], %181 {strides = array<i32>} : memref<8x4x32xf32, #tpu.memory_space<vmem>>, vector<1x4x32xf32>,
    %c4_i32_54 = arith.constant 4 : i32
    %c4_i32_55 = arith.constant 4 : i32
    %182 = arith.muli %c4_i32_54, %c4_i32_55 : i32
    %183 = arith.index_cast %182 : i32 to index
    %c0_56 = arith.constant 0 : index
    %184 = vector.load %arg9[%183, %c0_56] : memref<32x192xf32, #tpu.memory_space<vmem>>, vector<4x192xf32>
    %cst_57 = arith.constant dense<0.000000e+00> : vector<4x192xf32>
    %185 = tpu.matmul %170, %7, %cst_57 {dimension_numbers = #tpu.dot_dimension_numbers<[1], [0], [0], [1], [0, 0, 1, 1], [], []>} : vector<4x64xf32>, vector<64x192xf32>, vector<4x192xf32> -> vector<4x192xf32>
    %186 = vector.extract_strided_slice %184 {offsets = [0, 0], sizes = [4, 64], strides = [1, 1]} : vector<4x192xf32> to vector<4x64xf32>
    %187 = vector.extract_strided_slice %185 {offsets = [0, 0], sizes = [4, 64], strides = [1, 1]} : vector<4x192xf32> to vector<4x64xf32>
    %188 = arith.addf %186, %187 : vector<4x64xf32>
    %189 = arith.negf %188 : vector<4x64xf32>
    %190 = math.exp %189 : vector<4x64xf32>
    %cst_58 = arith.constant 1.000000e+00 : f32
    %191 = vector.broadcast %cst_58 : f32 to vector<4x64xf32>
    %192 = arith.addf %191, %190 : vector<4x64xf32>
    %193 = arith.divf %191, %192 : vector<4x64xf32>
    %194 = vector.extract_strided_slice %184 {offsets = [0, 64], sizes = [4, 64], strides = [1, 1]} : vector<4x192xf32> to vector<4x64xf32>
    %195 = vector.extract_strided_slice %185 {offsets = [0, 64], sizes = [4, 64], strides = [1, 1]} : vector<4x192xf32> to vector<4x64xf32>
    %196 = arith.addf %194, %195 : vector<4x64xf32>
    %197 = arith.negf %196 : vector<4x64xf32>
    %198 = math.exp %197 : vector<4x64xf32>
    %cst_59 = arith.constant 1.000000e+00 : f32
    %199 = vector.broadcast %cst_59 : f32 to vector<4x64xf32>
    %200 = arith.addf %199, %198 : vector<4x64xf32>
    %201 = arith.divf %199, %200 : vector<4x64xf32>
    %202 = vector.extract_strided_slice %184 {offsets = [0, 128], sizes = [4, 64], strides = [1, 1]} : vector<4x192xf32> to vector<4x64xf32>
    %203 = vector.extract_strided_slice %185 {offsets = [0, 128], sizes = [4, 64], strides = [1, 1]} : vector<4x192xf32> to vector<4x64xf32>
    %204 = vector.broadcast %8 : vector<1x64xf32> to vector<4x64xf32>
    %205 = arith.addf %203, %204 : vector<4x64xf32>
    %206 = arith.mulf %193, %205 : vector<4x64xf32>
    %207 = arith.addf %202, %206 : vector<4x64xf32>
    %208 = math.tanh %207 : vector<4x64xf32>
    %cst_60 = arith.constant 1.000000e+00 : f32
    %209 = vector.broadcast %cst_60 : f32 to vector<4x64xf32>
    %210 = arith.subf %209, %201 : vector<4x64xf32>
    %211 = arith.mulf %210, %208 : vector<4x64xf32>
    %212 = arith.mulf %201, %170 : vector<4x64xf32>
    %213 = arith.addf %211, %212 : vector<4x64xf32>
    %214 = vector.extract_strided_slice %213 {offsets = [0, 0], sizes = [4, 32], strides = [1, 1]} : vector<4x64xf32> to vector<4x32xf32>
    %215 = arith.index_cast %c4_i32_54 : i32 to index
    %c0_61 = arith.constant 0 : index
    %c0_62 = arith.constant 0 : index
    %216 = vector.load %arg10[%215, %c0_61, %c0_62] : memref<8x4x32xf32, #tpu.memory_space<vmem>>, vector<1x4x32xf32>
    %217 = vector.shape_cast %216 : vector<1x4x32xf32> to vector<4x32xf32>
    %218 = vector.shape_cast %214 : vector<4x32xf32> to vector<1x4x32xf32>
    tpu.vector_store %arg10[%215, %c0_61, %c0_62], %218 {strides = array<i32>} : memref<8x4x32xf32, #tpu.memory_space<vmem>>, vector<1x4x32xf32>,
    %219 = vector.extract_strided_slice %213 {offsets = [0, 32], sizes = [4, 32], strides = [1, 1]} : vector<4x64xf32> to vector<4x32xf32>
    %c7_i32_63 = arith.constant 7 : i32
    %220 = arith.subi %c7_i32_63, %c4_i32_54 : i32
    %221 = arith.index_cast %220 : i32 to index
    %c0_64 = arith.constant 0 : index
    %c0_65 = arith.constant 0 : index
    %222 = vector.load %arg11[%221, %c0_64, %c0_65] : memref<8x4x32xf32, #tpu.memory_space<vmem>>, vector<1x4x32xf32>
    %223 = vector.shape_cast %222 : vector<1x4x32xf32> to vector<4x32xf32>
    %224 = vector.shape_cast %219 : vector<4x32xf32> to vector<1x4x32xf32>
    tpu.vector_store %arg11[%221, %c0_64, %c0_65], %224 {strides = array<i32>} : memref<8x4x32xf32, #tpu.memory_space<vmem>>, vector<1x4x32xf32>,
    %c5_i32 = arith.constant 5 : i32
    %c4_i32_66 = arith.constant 4 : i32
    %225 = arith.muli %c5_i32, %c4_i32_66 : i32
    %226 = arith.index_cast %225 : i32 to index
    %c0_67 = arith.constant 0 : index
    %227 = vector.load %arg9[%226, %c0_67] : memref<32x192xf32, #tpu.memory_space<vmem>>, vector<4x192xf32>
    %cst_68 = arith.constant dense<0.000000e+00> : vector<4x192xf32>
    %228 = tpu.matmul %213, %7, %cst_68 {dimension_numbers = #tpu.dot_dimension_numbers<[1], [0], [0], [1], [0, 0, 1, 1], [], []>} : vector<4x64xf32>, vector<64x192xf32>, vector<4x192xf32> -> vector<4x192xf32>
    %229 = vector.extract_strided_slice %227 {offsets = [0, 0], sizes = [4, 64], strides = [1, 1]} : vector<4x192xf32> to vector<4x64xf32>
    %230 = vector.extract_strided_slice %228 {offsets = [0, 0], sizes = [4, 64], strides = [1, 1]} : vector<4x192xf32> to vector<4x64xf32>
    %231 = arith.addf %229, %230 : vector<4x64xf32>
    %232 = arith.negf %231 : vector<4x64xf32>
    %233 = math.exp %232 : vector<4x64xf32>
    %cst_69 = arith.constant 1.000000e+00 : f32
    %234 = vector.broadcast %cst_69 : f32 to vector<4x64xf32>
    %235 = arith.addf %234, %233 : vector<4x64xf32>
    %236 = arith.divf %234, %235 : vector<4x64xf32>
    %237 = vector.extract_strided_slice %227 {offsets = [0, 64], sizes = [4, 64], strides = [1, 1]} : vector<4x192xf32> to vector<4x64xf32>
    %238 = vector.extract_strided_slice %228 {offsets = [0, 64], sizes = [4, 64], strides = [1, 1]} : vector<4x192xf32> to vector<4x64xf32>
    %239 = arith.addf %237, %238 : vector<4x64xf32>
    %240 = arith.negf %239 : vector<4x64xf32>
    %241 = math.exp %240 : vector<4x64xf32>
    %cst_70 = arith.constant 1.000000e+00 : f32
    %242 = vector.broadcast %cst_70 : f32 to vector<4x64xf32>
    %243 = arith.addf %242, %241 : vector<4x64xf32>
    %244 = arith.divf %242, %243 : vector<4x64xf32>
    %245 = vector.extract_strided_slice %227 {offsets = [0, 128], sizes = [4, 64], strides = [1, 1]} : vector<4x192xf32> to vector<4x64xf32>
    %246 = vector.extract_strided_slice %228 {offsets = [0, 128], sizes = [4, 64], strides = [1, 1]} : vector<4x192xf32> to vector<4x64xf32>
    %247 = vector.broadcast %8 : vector<1x64xf32> to vector<4x64xf32>
    %248 = arith.addf %246, %247 : vector<4x64xf32>
    %249 = arith.mulf %236, %248 : vector<4x64xf32>
    %250 = arith.addf %245, %249 : vector<4x64xf32>
    %251 = math.tanh %250 : vector<4x64xf32>
    %cst_71 = arith.constant 1.000000e+00 : f32
    %252 = vector.broadcast %cst_71 : f32 to vector<4x64xf32>
    %253 = arith.subf %252, %244 : vector<4x64xf32>
    %254 = arith.mulf %253, %251 : vector<4x64xf32>
    %255 = arith.mulf %244, %213 : vector<4x64xf32>
    %256 = arith.addf %254, %255 : vector<4x64xf32>
    %257 = vector.extract_strided_slice %256 {offsets = [0, 0], sizes = [4, 32], strides = [1, 1]} : vector<4x64xf32> to vector<4x32xf32>
    %258 = arith.index_cast %c5_i32 : i32 to index
    %c0_72 = arith.constant 0 : index
    %c0_73 = arith.constant 0 : index
    %259 = vector.load %arg10[%258, %c0_72, %c0_73] : memref<8x4x32xf32, #tpu.memory_space<vmem>>, vector<1x4x32xf32>
    %260 = vector.shape_cast %259 : vector<1x4x32xf32> to vector<4x32xf32>
    %261 = vector.shape_cast %257 : vector<4x32xf32> to vector<1x4x32xf32>
    tpu.vector_store %arg10[%258, %c0_72, %c0_73], %261 {strides = array<i32>} : memref<8x4x32xf32, #tpu.memory_space<vmem>>, vector<1x4x32xf32>,
    %262 = vector.extract_strided_slice %256 {offsets = [0, 32], sizes = [4, 32], strides = [1, 1]} : vector<4x64xf32> to vector<4x32xf32>
    %c7_i32_74 = arith.constant 7 : i32
    %263 = arith.subi %c7_i32_74, %c5_i32 : i32
    %264 = arith.index_cast %263 : i32 to index
    %c0_75 = arith.constant 0 : index
    %c0_76 = arith.constant 0 : index
    %265 = vector.load %arg11[%264, %c0_75, %c0_76] : memref<8x4x32xf32, #tpu.memory_space<vmem>>, vector<1x4x32xf32>
    %266 = vector.shape_cast %265 : vector<1x4x32xf32> to vector<4x32xf32>
    %267 = vector.shape_cast %262 : vector<4x32xf32> to vector<1x4x32xf32>
    tpu.vector_store %arg11[%264, %c0_75, %c0_76], %267 {strides = array<i32>} : memref<8x4x32xf32, #tpu.memory_space<vmem>>, vector<1x4x32xf32>,
    %c6_i32 = arith.constant 6 : i32
    %c4_i32_77 = arith.constant 4 : i32
    %268 = arith.muli %c6_i32, %c4_i32_77 : i32
    %269 = arith.index_cast %268 : i32 to index
    %c0_78 = arith.constant 0 : index
    %270 = vector.load %arg9[%269, %c0_78] : memref<32x192xf32, #tpu.memory_space<vmem>>, vector<4x192xf32>
    %cst_79 = arith.constant dense<0.000000e+00> : vector<4x192xf32>
    %271 = tpu.matmul %256, %7, %cst_79 {dimension_numbers = #tpu.dot_dimension_numbers<[1], [0], [0], [1], [0, 0, 1, 1], [], []>} : vector<4x64xf32>, vector<64x192xf32>, vector<4x192xf32> -> vector<4x192xf32>
    %272 = vector.extract_strided_slice %270 {offsets = [0, 0], sizes = [4, 64], strides = [1, 1]} : vector<4x192xf32> to vector<4x64xf32>
    %273 = vector.extract_strided_slice %271 {offsets = [0, 0], sizes = [4, 64], strides = [1, 1]} : vector<4x192xf32> to vector<4x64xf32>
    %274 = arith.addf %272, %273 : vector<4x64xf32>
    %275 = arith.negf %274 : vector<4x64xf32>
    %276 = math.exp %275 : vector<4x64xf32>
    %cst_80 = arith.constant 1.000000e+00 : f32
    %277 = vector.broadcast %cst_80 : f32 to vector<4x64xf32>
    %278 = arith.addf %277, %276 : vector<4x64xf32>
    %279 = arith.divf %277, %278 : vector<4x64xf32>
    %280 = vector.extract_strided_slice %270 {offsets = [0, 64], sizes = [4, 64], strides = [1, 1]} : vector<4x192xf32> to vector<4x64xf32>
    %281 = vector.extract_strided_slice %271 {offsets = [0, 64], sizes = [4, 64], strides = [1, 1]} : vector<4x192xf32> to vector<4x64xf32>
    %282 = arith.addf %280, %281 : vector<4x64xf32>
    %283 = arith.negf %282 : vector<4x64xf32>
    %284 = math.exp %283 : vector<4x64xf32>
    %cst_81 = arith.constant 1.000000e+00 : f32
    %285 = vector.broadcast %cst_81 : f32 to vector<4x64xf32>
    %286 = arith.addf %285, %284 : vector<4x64xf32>
    %287 = arith.divf %285, %286 : vector<4x64xf32>
    %288 = vector.extract_strided_slice %270 {offsets = [0, 128], sizes = [4, 64], strides = [1, 1]} : vector<4x192xf32> to vector<4x64xf32>
    %289 = vector.extract_strided_slice %271 {offsets = [0, 128], sizes = [4, 64], strides = [1, 1]} : vector<4x192xf32> to vector<4x64xf32>
    %290 = vector.broadcast %8 : vector<1x64xf32> to vector<4x64xf32>
    %291 = arith.addf %289, %290 : vector<4x64xf32>
    %292 = arith.mulf %279, %291 : vector<4x64xf32>
    %293 = arith.addf %288, %292 : vector<4x64xf32>
    %294 = math.tanh %293 : vector<4x64xf32>
    %cst_82 = arith.constant 1.000000e+00 : f32
    %295 = vector.broadcast %cst_82 : f32 to vector<4x64xf32>
    %296 = arith.subf %295, %287 : vector<4x64xf32>
    %297 = arith.mulf %296, %294 : vector<4x64xf32>
    %298 = arith.mulf %287, %256 : vector<4x64xf32>
    %299 = arith.addf %297, %298 : vector<4x64xf32>
    %300 = vector.extract_strided_slice %299 {offsets = [0, 0], sizes = [4, 32], strides = [1, 1]} : vector<4x64xf32> to vector<4x32xf32>
    %301 = arith.index_cast %c6_i32 : i32 to index
    %c0_83 = arith.constant 0 : index
    %c0_84 = arith.constant 0 : index
    %302 = vector.load %arg10[%301, %c0_83, %c0_84] : memref<8x4x32xf32, #tpu.memory_space<vmem>>, vector<1x4x32xf32>
    %303 = vector.shape_cast %302 : vector<1x4x32xf32> to vector<4x32xf32>
    %304 = vector.shape_cast %300 : vector<4x32xf32> to vector<1x4x32xf32>
    tpu.vector_store %arg10[%301, %c0_83, %c0_84], %304 {strides = array<i32>} : memref<8x4x32xf32, #tpu.memory_space<vmem>>, vector<1x4x32xf32>,
    %305 = vector.extract_strided_slice %299 {offsets = [0, 32], sizes = [4, 32], strides = [1, 1]} : vector<4x64xf32> to vector<4x32xf32>
    %c7_i32_85 = arith.constant 7 : i32
    %306 = arith.subi %c7_i32_85, %c6_i32 : i32
    %307 = arith.index_cast %306 : i32 to index
    %c0_86 = arith.constant 0 : index
    %c0_87 = arith.constant 0 : index
    %308 = vector.load %arg11[%307, %c0_86, %c0_87] : memref<8x4x32xf32, #tpu.memory_space<vmem>>, vector<1x4x32xf32>
    %309 = vector.shape_cast %308 : vector<1x4x32xf32> to vector<4x32xf32>
    %310 = vector.shape_cast %305 : vector<4x32xf32> to vector<1x4x32xf32>
    tpu.vector_store %arg11[%307, %c0_86, %c0_87], %310 {strides = array<i32>} : memref<8x4x32xf32, #tpu.memory_space<vmem>>, vector<1x4x32xf32>,
    %c7_i32_88 = arith.constant 7 : i32
    %c4_i32_89 = arith.constant 4 : i32
    %311 = arith.muli %c7_i32_88, %c4_i32_89 : i32
    %312 = arith.index_cast %311 : i32 to index
    %c0_90 = arith.constant 0 : index
    %313 = vector.load %arg9[%312, %c0_90] : memref<32x192xf32, #tpu.memory_space<vmem>>, vector<4x192xf32>
    %cst_91 = arith.constant dense<0.000000e+00> : vector<4x192xf32>
    %314 = tpu.matmul %299, %7, %cst_91 {dimension_numbers = #tpu.dot_dimension_numbers<[1], [0], [0], [1], [0, 0, 1, 1], [], []>} : vector<4x64xf32>, vector<64x192xf32>, vector<4x192xf32> -> vector<4x192xf32>
    %315 = vector.extract_strided_slice %313 {offsets = [0, 0], sizes = [4, 64], strides = [1, 1]} : vector<4x192xf32> to vector<4x64xf32>
    %316 = vector.extract_strided_slice %314 {offsets = [0, 0], sizes = [4, 64], strides = [1, 1]} : vector<4x192xf32> to vector<4x64xf32>
    %317 = arith.addf %315, %316 : vector<4x64xf32>
    %318 = arith.negf %317 : vector<4x64xf32>
    %319 = math.exp %318 : vector<4x64xf32>
    %cst_92 = arith.constant 1.000000e+00 : f32
    %320 = vector.broadcast %cst_92 : f32 to vector<4x64xf32>
    %321 = arith.addf %320, %319 : vector<4x64xf32>
    %322 = arith.divf %320, %321 : vector<4x64xf32>
    %323 = vector.extract_strided_slice %313 {offsets = [0, 64], sizes = [4, 64], strides = [1, 1]} : vector<4x192xf32> to vector<4x64xf32>
    %324 = vector.extract_strided_slice %314 {offsets = [0, 64], sizes = [4, 64], strides = [1, 1]} : vector<4x192xf32> to vector<4x64xf32>
    %325 = arith.addf %323, %324 : vector<4x64xf32>
    %326 = arith.negf %325 : vector<4x64xf32>
    %327 = math.exp %326 : vector<4x64xf32>
    %cst_93 = arith.constant 1.000000e+00 : f32
    %328 = vector.broadcast %cst_93 : f32 to vector<4x64xf32>
    %329 = arith.addf %328, %327 : vector<4x64xf32>
    %330 = arith.divf %328, %329 : vector<4x64xf32>
    %331 = vector.extract_strided_slice %313 {offsets = [0, 128], sizes = [4, 64], strides = [1, 1]} : vector<4x192xf32> to vector<4x64xf32>
    %332 = vector.extract_strided_slice %314 {offsets = [0, 128], sizes = [4, 64], strides = [1, 1]} : vector<4x192xf32> to vector<4x64xf32>
    %333 = vector.broadcast %8 : vector<1x64xf32> to vector<4x64xf32>
    %334 = arith.addf %332, %333 : vector<4x64xf32>
    %335 = arith.mulf %322, %334 : vector<4x64xf32>
    %336 = arith.addf %331, %335 : vector<4x64xf32>
    %337 = math.tanh %336 : vector<4x64xf32>
    %cst_94 = arith.constant 1.000000e+00 : f32
    %338 = vector.broadcast %cst_94 : f32 to vector<4x64xf32>
    %339 = arith.subf %338, %330 : vector<4x64xf32>
    %340 = arith.mulf %339, %337 : vector<4x64xf32>
    %341 = arith.mulf %330, %299 : vector<4x64xf32>
    %342 = arith.addf %340, %341 : vector<4x64xf32>
    %343 = vector.extract_strided_slice %342 {offsets = [0, 0], sizes = [4, 32], strides = [1, 1]} : vector<4x64xf32> to vector<4x32xf32>
    %344 = arith.index_cast %c7_i32_88 : i32 to index
    %c0_95 = arith.constant 0 : index
    %c0_96 = arith.constant 0 : index
    %345 = vector.load %arg10[%344, %c0_95, %c0_96] : memref<8x4x32xf32, #tpu.memory_space<vmem>>, vector<1x4x32xf32>
    %346 = vector.shape_cast %345 : vector<1x4x32xf32> to vector<4x32xf32>
    %347 = vector.shape_cast %343 : vector<4x32xf32> to vector<1x4x32xf32>
    tpu.vector_store %arg10[%344, %c0_95, %c0_96], %347 {strides = array<i32>} : memref<8x4x32xf32, #tpu.memory_space<vmem>>, vector<1x4x32xf32>,
    %348 = vector.extract_strided_slice %342 {offsets = [0, 32], sizes = [4, 32], strides = [1, 1]} : vector<4x64xf32> to vector<4x32xf32>
    %c7_i32_97 = arith.constant 7 : i32
    %349 = arith.subi %c7_i32_97, %c7_i32_88 : i32
    %350 = arith.index_cast %349 : i32 to index
    %c0_98 = arith.constant 0 : index
    %c0_99 = arith.constant 0 : index
    %351 = vector.load %arg11[%350, %c0_98, %c0_99] : memref<8x4x32xf32, #tpu.memory_space<vmem>>, vector<1x4x32xf32>
    %352 = vector.shape_cast %351 : vector<1x4x32xf32> to vector<4x32xf32>
    %353 = vector.shape_cast %348 : vector<4x32xf32> to vector<1x4x32xf32>
    tpu.vector_store %arg11[%350, %c0_98, %c0_99], %353 {strides = array<i32>} : memref<8x4x32xf32, #tpu.memory_space<vmem>>, vector<1x4x32xf32>,
    %c8_i32 = arith.constant 8 : i32
    %c0_100 = arith.constant 0 : index
    %c0_101 = arith.constant 0 : index
    %c0_102 = arith.constant 0 : index
    %354 = vector.load %arg10[%c0_100, %c0_101, %c0_102] : memref<8x4x32xf32, #tpu.memory_space<vmem>>, vector<8x4x32xf32>
    %c0_103 = arith.constant 0 : index
    %c0_104 = arith.constant 0 : index
    %c0_105 = arith.constant 0 : index
    %355 = vector.load %arg11[%c0_103, %c0_104, %c0_105] : memref<8x4x32xf32, #tpu.memory_space<vmem>>, vector<8x4x32xf32>
    %356 = tpu.concatenate %354, %355 in 2 : vector<8x4x32xf32>, vector<8x4x32xf32> -> vector<8x4x64xf32>
    %c0_106 = arith.constant 0 : index
    %c0_107 = arith.constant 0 : index
    %c0_108 = arith.constant 0 : index
    %357 = vector.load %arg7[%c0_106, %c0_107, %c0_108] : memref<8x4x64xf32, #tpu.memory_space<vmem>>, vector<8x4x64xf32>
    tpu.vector_store %arg7[%c0_106, %c0_107, %c0_108], %356 {strides = array<i32>} : memref<8x4x64xf32, #tpu.memory_space<vmem>>, vector<8x4x64xf32>,
    %c0_109 = arith.constant 0 : index
    %c0_110 = arith.constant 0 : index
    %358 = vector.load %arg5[%c0_109, %c0_110] : memref<64x32xf32, #tpu.memory_space<vmem>>, vector<64x32xf32>
    %cst_111 = arith.constant dense<0.000000e+00> : vector<4x32xf32>
    %359 = tpu.matmul %342, %358, %cst_111 {dimension_numbers = #tpu.dot_dimension_numbers<[1], [0], [0], [1], [0, 0, 1, 1], [], []>} : vector<4x64xf32>, vector<64x32xf32>, vector<4x32xf32> -> vector<4x32xf32>
    %c0_112 = arith.constant 0 : index
    %c0_113 = arith.constant 0 : index
    %360 = vector.load %arg6[%c0_112, %c0_113] : memref<1x32xf32, #tpu.memory_space<vmem>>, vector<1x32xf32>
    %361 = vector.broadcast %360 : vector<1x32xf32> to vector<4x32xf32>
    %362 = arith.addf %359, %361 : vector<4x32xf32>
    %363 = math.tanh %362 : vector<4x32xf32>
    %c0_114 = arith.constant 0 : index
    %c0_115 = arith.constant 0 : index
    %364 = vector.load %arg8[%c0_114, %c0_115] : memref<4x32xf32, #tpu.memory_space<vmem>>, vector<4x32xf32>
    tpu.vector_store %arg8[%c0_114, %c0_115], %363 {strides = array<i32>} : memref<4x32xf32, #tpu.memory_space<vmem>>, vector<4x32xf32>,
    return
  }
}

</mosaic_0001>

<llo_original>
// kernel: tpu_custom_call.1
$region0: #{tpu_custom_call.1}
  #allocation0 [shape = 'u32[]', space=smem, size = 0x4, offset = 0x4, fixed_abs, tag = 'smem constant byte address 0x4 - core index']
  #allocation1 [shape = 'u32[144,128]{1,0:T(1,128)}', space=vmem, size = 0x12000, scoped, tag = 'internal scratch']
  #allocation2 [shape = 'f32[32,192]{1,0:T(8,128)}', space=vmem, size = 0x8000, scoped, tag = 'scratch operand']
  #allocation3 [shape = 'f32[8,4,32]{2,1,0:T(4,128)}', space=vmem, size = 0x4000, scoped, tag = 'scratch operand']
  #allocation4 [shape = 'f32[8,4,32]{2,1,0:T(4,128)}', space=vmem, size = 0x4000, scoped, tag = 'scratch operand']
  %s0 = inlined_call_operand.vmem [shape: f32[32,64], index: 0, kind: input, shape index: {}]
  %s1 = inlined_call_operand.hbm [shape: f32[64,192], index: 1, kind: input, shape index: {}]
  %s2 = inlined_call_operand.vmem [shape: f32[1,192], index: 2, kind: input, shape index: {}]
  %s3 = inlined_call_operand.hbm [shape: f32[64,192], index: 3, kind: input, shape index: {}]
  %s4 = inlined_call_operand.vmem [shape: f32[1,64], index: 4, kind: input, shape index: {}]
  %s5 = inlined_call_operand.vmem [shape: f32[64,32], index: 5, kind: input, shape index: {}]
  %s6 = inlined_call_operand.vmem [shape: f32[1,32], index: 6, kind: input, shape index: {}]
  %s7 = inlined_call_operand.hbm [shape: f32[8,4,64], index: 7, kind: output, shape index: {0}]
  %s8 = inlined_call_operand.hbm [shape: f32[4,32], index: 8, kind: output, shape index: {1}]
  %9 = xla_tuple %s7, %s8
  %s10 = sld [smem:[#allocation0]]
  $region54: #{tpu_custom_call.1} parent=0
    _
  %s12 = ssub.s32 1, %s10
  %s13 = scalar_select 0, %s12, %s10
  $region1: #{tpu_custom_call.1} parent=0
    #allocation5 [shape = 'u8[65536]{0}', space=vmem, size = 0x10000, scoped, tag = 'input window, operand 1, single buffered']
    #allocation6 [shape = 's32[1]{0}', space=sflag, size = 0x4, scoped, tag = 'scoped memory for tpu_custom_call.1']
    #allocation7 [shape = 's32[1]{0}', space=sflag, size = 0x4, scoped, tag = 'scoped memory for tpu_custom_call.1']
    #allocation8 [shape = 'u8[65536]{0}', space=vmem, size = 0x10000, scoped, tag = 'input window, operand 3, single buffered']
    #allocation9 [shape = 's32[1]{0}', space=sflag, size = 0x4, scoped, tag = 'scoped memory for tpu_custom_call.1']
    #allocation10 [shape = 'u8[16384]{0}', space=vmem, size = 0x4000, scoped, tag = 'output window, operand 0, single buffered']
    #allocation11 [shape = 'u8[2048]{0}', space=vmem, size = 0x800, scoped, tag = 'output window, operand 1, single buffered']
    #allocation12 [shape = 's32[1]{0}', space=sflag, size = 0x4, scoped, tag = 'scoped memory for tpu_custom_call.1']
    %14 = vsyncpa [#allocation6], 0
    %15 = vsyncpa [#allocation9], 0
    %16 = vsyncpa [#allocation7], 0
    %17 = vsyncpa [#allocation12], 0
    // Predicated region
    $region2: #{tpu_custom_call.1} parent=1 // pred_check
      _
    $region3: #{tpu_custom_call.1} parent=1 // pred_check_branch
      %19 = sbr.rel (0) target = $region5
    $region4: #{tpu_custom_call.1} parent=1 // pred_region
      _
    $region5: #{tpu_custom_call.1} parent=1 // pred_fallthru
      _
    // Predicated region
    $region6: #{tpu_custom_call.1} parent=1 // pred_check
      _
    $region7: #{tpu_custom_call.1} parent=1 // pred_check_branch
      %21 = sbr.rel (0) target = $region9
    $region8: #{tpu_custom_call.1} parent=1 // pred_region
      %s23 = ssub.s32 2048, 2048
      %24 = vsyncadd [#allocation6], %s23
      %s25 = sshll.u32 [#allocation5], 4
      %s26 = int_to_ptr.vmem [resolvable:$true] %s25
      %31 = dma.hbm_to_vmem [thread:$0]  %s1, 2048, %s26, [#allocation6], 256, 256, 16
    $region9: #{tpu_custom_call.1} parent=1 // pred_fallthru
      _
    // Predicated region
    $region10: #{tpu_custom_call.1} parent=1 // pred_check
      _
    $region11: #{tpu_custom_call.1} parent=1 // pred_check_branch
      %33 = sbr.rel (0) target = $region13
    $region12: #{tpu_custom_call.1} parent=1 // pred_region
      _
    $region13: #{tpu_custom_call.1} parent=1 // pred_fallthru
      _
    // Predicated region
    $region14: #{tpu_custom_call.1} parent=1 // pred_check
      _
    $region15: #{tpu_custom_call.1} parent=1 // pred_check_branch
      %35 = sbr.rel (0) target = $region17
    $region16: #{tpu_custom_call.1} parent=1 // pred_region
      %s37 = ssub.s32 2048, 2048
      %38 = vsyncadd [#allocation9], %s37
      %s39 = sshll.u32 [#allocation8], 4
      %s40 = int_to_ptr.vmem [resolvable:$true] %s39
      %45 = dma.hbm_to_vmem [thread:$0]  %s3, 2048, %s40, [#allocation9], 256, 256, 16
    $region17: #{tpu_custom_call.1} parent=1 // pred_fallthru
      _
    // Predicated region
    $region18: #{tpu_custom_call.1} parent=1 // pred_check
      _
    $region19: #{tpu_custom_call.1} parent=1 // pred_check_branch
      %47 = sbr.rel (0) target = $region21
    $region20: #{tpu_custom_call.1} parent=1 // pred_region
      _
    $region21: #{tpu_custom_call.1} parent=1 // pred_fallthru
      _
    // Predicated region
    $region22: #{tpu_custom_call.1} parent=1 // pred_check
      _
    $region23: #{tpu_custom_call.1} parent=1 // pred_check_branch
      %49 = sbr.rel (0) target = $region25
    $region24: #{tpu_custom_call.1} parent=1 // pred_region
      _
    $region25: #{tpu_custom_call.1} parent=1 // pred_fallthru
      _
    // Predicated region
    $region26: #{tpu_custom_call.1} parent=1 // pred_check
      _
    $region27: #{tpu_custom_call.1} parent=1 // pred_check_branch
      %51 = sbr.rel (0) target = $region29
    $region28: #{tpu_custom_call.1} parent=1 // pred_region
      _
    $region29: #{tpu_custom_call.1} parent=1 // pred_fallthru
      _
    // Predicated region
    $region30: #{tpu_custom_call.1} parent=1 // pred_check
      _
    $region31: #{tpu_custom_call.1} parent=1 // pred_check_branch
      %53 = sbr.rel (0) target = $region33
    $region32: #{tpu_custom_call.1} parent=1 // pred_region
      %54 = dma.done [#allocation6], 2048
    $region33: #{tpu_custom_call.1} parent=1 // pred_fallthru
      _
    // Predicated region
    $region34: #{tpu_custom_call.1} parent=1 // pred_check
      _
    $region35: #{tpu_custom_call.1} parent=1 // pred_check_branch
      %56 = sbr.rel (0) target = $region37
    $region36: #{tpu_custom_call.1} parent=1 // pred_region
      %57 = dma.done [#allocation9], 2048
    $region37: #{tpu_custom_call.1} parent=1 // pred_fallthru
      _
    %v58 = vld [vmem:[%s0] sm:$0xff]
    %v59 = vld [vmem:[%s0 + $0x8] sm:$0xff]
    %v60 = vld [vmem:[%s0 + $0x10] sm:$0xff]
    %v61 = vld [vmem:[%s0 + $0x18] sm:$0xff]
    %v62 = vld [vmem:[#allocation5] sm:$0xff]
    %v63 = vld [vmem:[#allocation5 + $0x8] sm:$0xff]
    %v64 = vld [vmem:[#allocation5 + $0x10] sm:$0xff]
    %v65 = vld [vmem:[#allocation5 + $0x18] sm:$0xff]
    %v66 = vld [vmem:[#allocation5 + $0x20] sm:$0xff]
    %v67 = vld [vmem:[#allocation5 + $0x28] sm:$0xff]
    %v68 = vld [vmem:[#allocation5 + $0x30] sm:$0xff]
    %v69 = vld [vmem:[#allocation5 + $0x38] sm:$0xff]
    %v70 = vld [vmem:[#allocation5 + $0x40] sm:$0xff]
    %v71 = vld [vmem:[#allocation5 + $0x48] sm:$0xff]
    %v72 = vld [vmem:[#allocation5 + $0x50] sm:$0xff]
    %v73 = vld [vmem:[#allocation5 + $0x58] sm:$0xff]
    %v74 = vld [vmem:[#allocation5 + $0x60] sm:$0xff]
    %v75 = vld [vmem:[#allocation5 + $0x68] sm:$0xff]
    %v76 = vld [vmem:[#allocation5 + $0x70] sm:$0xff]
    %v77 = vld [vmem:[#allocation5 + $0x78] sm:$0xff]
    %v78 = vld [vmem:[%s2] sm:$0x3]
    %v80 = vlaneseq
    %v81 = vshrl.u32 %v80, 7
    %v82 = vsub.s32 0, %v81
    %v83 = vrot.slane %v78, %v82
    %v84 = vlaneseq
    %v85 = vshrl.u32 %v84, 7
    %v86 = vsub.s32 1, %v85
    %v87 = vrot.slane %v78, %v86
    %vm90 = vcmask 523264
    %v92 = vsel %vm90, %v58, 0
    %v95 = vsel %vm90, %v59, 0
    %v98 = vsel %vm90, %v60, 0
    %v101 = vsel %vm90, %v61, 0
    %103 = vmatprep.subr.mxu0 %v63
    %104 = vmatpush1.msra.mxu0 %v62
    %105 = vmatprep.subr.mxu0 %v65
    %106 = vmatpush1.msra.mxu0 %v64
    %107 = vmatprep.subr.mxu0 %v67
    %108 = vmatpush1.msra.mxu0 %v66
    %109 = vmatprep.subr.mxu0 %v69
    %110 = vmatpush1.msra.mxu0 %v68
    %111 = vmatprep.subr.mxu0 %v71
    %112 = vmatpush1.msra.mxu0 %v70
    %113 = vmatprep.subr.mxu0 %v73
    %114 = vmatpush1.msra.mxu0 %v72
    %115 = vmatprep.subr.mxu0 %v75
    %116 = vmatpush1.msra.mxu0 %v74
    %117 = vmatprep.subr.mxu0 %v77
    %118 = vmatpush1.msra.mxu0 %v76
    %119 = vmatprep.subr.mxu0 0.0
    %120 = vmatpush1.msra.mxu0 0.0
    %121 = vmatprep.subr.mxu0 0.0
    %122 = vmatpush1.msra.mxu0 0.0
    %123 = vmatprep.subr.mxu0 0.0
    %124 = vmatpush1.msra.mxu0 0.0
    %125 = vmatprep.subr.mxu0 0.0
    %126 = vmatpush1.msra.mxu0 0.0
    %127 = vmatprep.subr.mxu0 0.0
    %128 = vmatpush1.msra.mxu0 0.0
    %129 = vmatprep.subr.mxu0 0.0
    %130 = vmatpush1.msra.mxu0 0.0
    %131 = vmatprep.subr.mxu0 0.0
    %132 = vmatpush1.msra.mxu0 0.0
    %133 = vmatprep.subr.mxu0 0.0
    %134 = vmatpush1.msra.mxu0 0.0
    %135 = vmatprep.subr.mxu0 0.0
    %136 = vmatpush1.msra.mxu0 0.0
    %137 = vmatprep.subr.mxu0 0.0
    %138 = vmatpush1.msra.mxu0 0.0
    %139 = vmatprep.subr.mxu0 0.0
    %140 = vmatpush1.msra.mxu0 0.0
    %141 = vmatprep.subr.mxu0 0.0
    %142 = vmatpush1.msra.mxu0 0.0
    %143 = vmatprep.subr.mxu0 0.0
    %144 = vmatpush1.msra.mxu0 0.0
    %145 = vmatprep.subr.mxu0 0.0
    %146 = vmatpush1.msra.mxu0 0.0
    %147 = vmatprep.subr.mxu0 0.0
    %148 = vmatpush1.msra.mxu0 0.0
    %149 = vmatprep.subr.mxu0 0.0
    %150 = vmatpush1.msra.mxu0 0.0
    %151 = vmatprep.subr.mxu0 0.0
    %152 = vmatpush1.msra.mxu0 0.0
    %153 = vmatprep.subr.mxu0 0.0
    %154 = vmatpush1.msra.mxu0 0.0
    %155 = vmatprep.subr.mxu0 0.0
    %156 = vmatpush1.msra.mxu0 0.0
    %157 = vmatprep.subr.mxu0 0.0
    %158 = vmatpush1.msra.mxu0 0.0
    %159 = vmatprep.subr.mxu0 0.0
    %160 = vmatpush1.msra.mxu0 0.0
    %161 = vmatprep.subr.mxu0 0.0
    %162 = vmatpush1.msra.mxu0 0.0
    %163 = vmatprep.subr.mxu0 0.0
    %164 = vmatpush1.msra.mxu0 0.0
    %165 = vmatprep.subr.mxu0 0.0
    %166 = vmatpush1.msra.mxu0 0.0
    %167 = vmatprep.mubr.f32.mxu0 0.0
    %168 = vmatmul.mubr.f32.gmra.mrb[0].mxu0 %v92
    %v169 = vpop.f32.mrb[0].mxu0
    %v170 = vadd.f32 %v83, %v169
    %v171 = vpop.f32.mrb[0].mxu0
    %v172 = vadd.f32 %v87, %v171
    %173 = vmatprep.mubr.f32.mxu0 0.0
    %174 = vmatmul.mubr.f32.gmra.mrb[0].mxu0 %v95
    %v175 = vpop.f32.mrb[0].mxu0
    %v176 = vadd.f32 %v83, %v175
    %v177 = vpop.f32.mrb[0].mxu0
    %v178 = vadd.f32 %v87, %v177
    %179 = vmatprep.mubr.f32.mxu0 0.0
    %180 = vmatmul.mubr.f32.gmra.mrb[0].mxu0 %v98
    %v181 = vpop.f32.mrb[0].mxu0
    %v182 = vadd.f32 %v83, %v181
    %v183 = vpop.f32.mrb[0].mxu0
    %v184 = vadd.f32 %v87, %v183
    %185 = vmatprep.mubr.f32.mxu0 0.0
    %186 = vmatmul.mubr.f32.gmra.mrb[0].mxu0 %v101
    %v187 = vpop.f32.mrb[0].mxu0
    %v188 = vadd.f32 %v83, %v187
    %v189 = vpop.f32.mrb[0].mxu0
    %v190 = vadd.f32 %v87, %v189
    %191 = vdwg.mxu0
    %192 = vst [vmem:[#allocation2] sm:$0xff] %v170
    %193 = vst.msk [vmem:[#allocation2 + $0x8] sm:$0xff] %vm90, %v172
    %194 = vst [vmem:[#allocation2 + $0x10] sm:$0xff] %v176
    %195 = vst.msk [vmem:[#allocation2 + $0x18] sm:$0xff] %vm90, %v178
    %196 = vst [vmem:[#allocation2 + $0x20] sm:$0xff] %v182
    %197 = vst.msk [vmem:[#allocation2 + $0x28] sm:$0xff] %vm90, %v184
    %198 = vst [vmem:[#allocation2 + $0x30] sm:$0xff] %v188
    %199 = vst.msk [vmem:[#allocation2 + $0x38] sm:$0xff] %vm90, %v190
    %v200 = vld [vmem:[#allocation8] sm:$0xff]
    %v201 = vld [vmem:[#allocation8 + $0x8] sm:$0xff]
    %v202 = vld [vmem:[#allocation8 + $0x10] sm:$0xff]
    %v203 = vld [vmem:[#allocation8 + $0x18] sm:$0xff]
    %v204 = vld [vmem:[#allocation8 + $0x20] sm:$0xff]
    %v205 = vld [vmem:[#allocation8 + $0x28] sm:$0xff]
    %v206 = vld [vmem:[#allocation8 + $0x30] sm:$0xff]
    %v207 = vld [vmem:[#allocation8 + $0x38] sm:$0xff]
    %v208 = vld [vmem:[#allocation8 + $0x40] sm:$0xff]
    %v209 = vld [vmem:[#allocation8 + $0x48] sm:$0xff]
    %v210 = vld [vmem:[#allocation8 + $0x50] sm:$0xff]
    %v211 = vld [vmem:[#allocation8 + $0x58] sm:$0xff]
    %v212 = vld [vmem:[#allocation8 + $0x60] sm:$0xff]
    %v213 = vld [vmem:[#allocation8 + $0x68] sm:$0xff]
    %v214 = vld [vmem:[#allocation8 + $0x70] sm:$0xff]
    %v215 = vld [vmem:[#allocation8 + $0x78] sm:$0xff]
    %v216 = vld [vmem:[%s4] sm:$0x1]
    %v217 = vld [vmem:[#allocation2] sm:$0xf]
    %v218 = vld [vmem:[#allocation2 + $0x8] sm:$0xf]
    %v220 = vsel %vm90, 0.0, 0
    %222 = vmatprep.subr.mxu0 %v201
    %223 = vmatpush1.msra.mxu0 %v200
    %224 = vmatprep.subr.mxu0 %v203
    %225 = vmatpush1.msra.mxu0 %v202
    %226 = vmatprep.subr.mxu0 %v205
    %227 = vmatpush1.msra.mxu0 %v204
    %228 = vmatprep.subr.mxu0 %v207
    %229 = vmatpush1.msra.mxu0 %v206
    %230 = vmatprep.subr.mxu0 %v209
    %231 = vmatpush1.msra.mxu0 %v208
    %232 = vmatprep.subr.mxu0 %v211
    %233 = vmatpush1.msra.mxu0 %v210
    %234 = vmatprep.subr.mxu0 %v213
    %235 = vmatpush1.msra.mxu0 %v212
    %236 = vmatprep.subr.mxu0 %v215
    %237 = vmatpush1.msra.mxu0 %v214
    %238 = vmatprep.subr.mxu0 0.0
    %239 = vmatpush1.msra.mxu0 0.0
    %240 = vmatprep.subr.mxu0 0.0
    %241 = vmatpush1.msra.mxu0 0.0
    %242 = vmatprep.subr.mxu0 0.0
    %243 = vmatpush1.msra.mxu0 0.0
    %244 = vmatprep.subr.mxu0 0.0
    %245 = vmatpush1.msra.mxu0 0.0
    %246 = vmatprep.subr.mxu0 0.0
    %247 = vmatpush1.msra.mxu0 0.0
    %248 = vmatprep.subr.mxu0 0.0
    %249 = vmatpush1.msra.mxu0 0.0
    %250 = vmatprep.subr.mxu0 0.0
    %251 = vmatpush1.msra.mxu0 0.0
    %252 = vmatprep.subr.mxu0 0.0
    %253 = vmatpush1.msra.mxu0 0.0
    %254 = vmatprep.subr.mxu0 0.0
    %255 = vmatpush1.msra.mxu0 0.0
    %256 = vmatprep.subr.mxu0 0.0
    %257 = vmatpush1.msra.mxu0 0.0
    %258 = vmatprep.subr.mxu0 0.0
    %259 = vmatpush1.msra.mxu0 0.0
    %260 = vmatprep.subr.mxu0 0.0
    %261 = vmatpush1.msra.mxu0 0.0
    %262 = vmatprep.subr.mxu0 0.0
    %263 = vmatpush1.msra.mxu0 0.0
    %264 = vmatprep.subr.mxu0 0.0
    %265 = vmatpush1.msra.mxu0 0.0
    %266 = vmatprep.subr.mxu0 0.0
    %267 = vmatpush1.msra.mxu0 0.0
    %268 = vmatprep.subr.mxu0 0.0
    %269 = vmatpush1.msra.mxu0 0.0
    %270 = vmatprep.subr.mxu0 0.0
    %271 = vmatpush1.msra.mxu0 0.0
    %272 = vmatprep.subr.mxu0 0.0
    %273 = vmatpush1.msra.mxu0 0.0
    %274 = vmatprep.subr.mxu0 0.0
    %275 = vmatpush1.msra.mxu0 0.0
    %276 = vmatprep.subr.mxu0 0.0
    %277 = vmatpush1.msra.mxu0 0.0
    %278 = vmatprep.subr.mxu0 0.0
    %279 = vmatpush1.msra.mxu0 0.0
    %280 = vmatprep.subr.mxu0 0.0
    %281 = vmatpush1.msra.mxu0 0.0
    %282 = vmatprep.subr.mxu0 0.0
    %283 = vmatpush1.msra.mxu0 0.0
    %284 = vmatprep.subr.mxu0 0.0
    %285 = vmatpush1.msra.mxu0 0.0
    %286 = vmatprep.mubr.f32.mxu0 0.0
    %287 = vmatmul.mubr.f32.gmra.mrb[0].mxu0 %v220
    %v288 = vpop.f32.mrb[0].mxu0
    %v289 = vadd.f32 0.0, %v288
    %v290 = vpop.f32.mrb[0].mxu0
    %v291 = vadd.f32 0.0, %v290
    %292 = vdwg.mxu0
    %v293 = vadd.f32 %v217, %v289
    %v294 = vxor.u32 %v293, 2147483648
    %v295 = vmul.f32 %v294, 1.442695
    %v296 = vpow.pop %v295
    %v297 = vadd.f32 %v296, 1.0
    %v298 = vrcp.pop %v297
    %v299 = vmul.f32 1.0, %v298
    %v301 = vlaneseq
    %v302 = vshrl.u32 %v301, 7
    %v303 = vsub.s32 0, %v302
    %v304 = vrot.slane %v216, %v303
    %v306 = vadd.f32 %v291, %v304
    %v307 = vmul.f32 %v299, %v306
    %v308 = vadd.f32 %v218, %v307
    %v309 = vtanh.pop %v308
    %v310 = vsub.f32 1.0, %v299
    %312 = vrot.lane.b32.xlu0 %v309, 64
    %v313 = vpop.permute.xlu0 %312
    %v315 = vmul.f32 %v310, %v313
    %v316 = vmul.f32 %v299, 0.0
    %v317 = vadd.f32 %v315, %v316
    %319 = vrot.lane.b32.xlu0 %v317, 64
    %v320 = vpop.permute.xlu0 %319
    %vm322 = vcmask 257024
    %323 = vst.msk [vmem:[#allocation3] sm:$0xf] %vm322, %v320
    %324 = vrot.lane.b32.xlu0 %v317, 32
    %v325 = vpop.permute.xlu0 %324
    %s327 = scalar_lea.vmem [#allocation4], 28
    %328 = vst.msk [vmem:[%s327] sm:$0xf] %vm322, %v325
    %v329 = vld [vmem:[#allocation2] sm:$0xf0]
    %v330 = vld [vmem:[#allocation2 + $0x8] sm:$0xf0]
    %v331 = vsel %vm90, %v320, 0
    %333 = vmatprep.subr.mxu0 %v201
    %334 = vmatpush1.msra.mxu0 %v200
    %335 = vmatprep.subr.mxu0 %v203
    %336 = vmatpush1.msra.mxu0 %v202
    %337 = vmatprep.subr.mxu0 %v205
    %338 = vmatpush1.msra.mxu0 %v204
    %339 = vmatprep.subr.mxu0 %v207
    %340 = vmatpush1.msra.mxu0 %v206
    %341 = vmatprep.subr.mxu0 %v209
    %342 = vmatpush1.msra.mxu0 %v208
    %343 = vmatprep.subr.mxu0 %v211
    %344 = vmatpush1.msra.mxu0 %v210
    %345 = vmatprep.subr.mxu0 %v213
    %346 = vmatpush1.msra.mxu0 %v212
    %347 = vmatprep.subr.mxu0 %v215
    %348 = vmatpush1.msra.mxu0 %v214
    %349 = vmatprep.subr.mxu0 0.0
    %350 = vmatpush1.msra.mxu0 0.0
    %351 = vmatprep.subr.mxu0 0.0
    %352 = vmatpush1.msra.mxu0 0.0
    %353 = vmatprep.subr.mxu0 0.0
    %354 = vmatpush1.msra.mxu0 0.0
    %355 = vmatprep.subr.mxu0 0.0
    %356 = vmatpush1.msra.mxu0 0.0
    %357 = vmatprep.subr.mxu0 0.0
    %358 = vmatpush1.msra.mxu0 0.0
    %359 = vmatprep.subr.mxu0 0.0
    %360 = vmatpush1.msra.mxu0 0.0
    %361 = vmatprep.subr.mxu0 0.0
    %362 = vmatpush1.msra.mxu0 0.0
    %363 = vmatprep.subr.mxu0 0.0
    %364 = vmatpush1.msra.mxu0 0.0
    %365 = vmatprep.subr.mxu0 0.0
    %366 = vmatpush1.msra.mxu0 0.0
    %367 = vmatprep.subr.mxu0 0.0
    %368 = vmatpush1.msra.mxu0 0.0
    %369 = vmatprep.subr.mxu0 0.0
    %370 = vmatpush1.msra.mxu0 0.0
    %371 = vmatprep.subr.mxu0 0.0
    %372 = vmatpush1.msra.mxu0 0.0
    %373 = vmatprep.subr.mxu0 0.0
    %374 = vmatpush1.msra.mxu0 0.0
    %375 = vmatprep.subr.mxu0 0.0
    %376 = vmatpush1.msra.mxu0 0.0
    %377 = vmatprep.subr.mxu0 0.0
    %378 = vmatpush1.msra.mxu0 0.0
    %379 = vmatprep.subr.mxu0 0.0
    %380 = vmatpush1.msra.mxu0 0.0
    %381 = vmatprep.subr.mxu0 0.0
    %382 = vmatpush1.msra.mxu0 0.0
    %383 = vmatprep.subr.mxu0 0.0
    %384 = vmatpush1.msra.mxu0 0.0
    %385 = vmatprep.subr.mxu0 0.0
    %386 = vmatpush1.msra.mxu0 0.0
    %387 = vmatprep.subr.mxu0 0.0
    %388 = vmatpush1.msra.mxu0 0.0
    %389 = vmatprep.subr.mxu0 0.0
    %390 = vmatpush1.msra.mxu0 0.0
    %391 = vmatprep.subr.mxu0 0.0
    %392 = vmatpush1.msra.mxu0 0.0
    %393 = vmatprep.subr.mxu0 0.0
    %394 = vmatpush1.msra.mxu0 0.0
    %395 = vmatprep.subr.mxu0 0.0
    %396 = vmatpush1.msra.mxu0 0.0
    %397 = vmatprep.mubr.f32.mxu0 0.0
    %398 = vmatmul.mubr.f32.gmra.mrb[0].mxu0 %v331
    %v399 = vpop.f32.mrb[0].mxu0
    %v400 = vadd.f32 0.0, %v399
    %v401 = vpop.f32.mrb[0].mxu0
    %v402 = vadd.f32 0.0, %v401
    %403 = vdwg.mxu0
    %v405 = vrot.slane %v400, 4
    %v407 = vadd.f32 %v329, %v405
    %v408 = vxor.u32 %v407, 2147483648
    %v409 = vmul.f32 %v408, 1.442695
    %v410 = vpow.pop %v409
    %v411 = vadd.f32 %v410, 1.0
    %v412 = vrcp.pop %v411
    %v413 = vmul.f32 1.0, %v412
    %v414 = vadd.f32 %v402, %v304
    %v416 = vrot.slane %v414, 4
    %v418 = vmul.f32 %v413, %v416
    %v419 = vadd.f32 %v330, %v418
    %v420 = vtanh.pop %v419
    %v421 = vsub.f32 1.0, %v413
    %423 = vrot.lane.b32.xlu0 %v420, 64
    %v424 = vpop.permute.xlu0 %423
    %v426 = vmul.f32 %v421, %v424
    %v427 = vrot.slane %v317, 4
    %v429 = vmul.f32 %v413, %v427
    %v430 = vadd.f32 %v426, %v429
    %432 = vrot.lane.b32.xlu0 %v430, 64
    %v433 = vpop.permute.xlu0 %432
    %s435 = scalar_lea.vmem [#allocation3], 4
    %vm436 = vcmask 261124
    %437 = vst.msk [vmem:[%s435 - $0x4] sm:$0xf0] %vm436, %v433
    %438 = vrot.lane.b32.xlu0 %v430, 32
    %v439 = vpop.permute.xlu0 %438
    %s441 = scalar_lea.vmem [#allocation4], 24
    %442 = vst.msk [vmem:[%s441 - $0x4] sm:$0xf0] %vm436, %v439
    %v443 = vld [vmem:[#allocation2 + $0x10] sm:$0xf]
    %v444 = vld [vmem:[#allocation2 + $0x18] sm:$0xf]
    %v445 = vrot.slane %v430, 4
    %446 = vrot.lane.b32.xlu0 %v445, 64
    %v447 = vpop.permute.xlu0 %446
    %v448 = vsel %vm90, %v447, 0
    %450 = vmatprep.subr.mxu0 %v201
    %451 = vmatpush1.msra.mxu0 %v200
    %452 = vmatprep.subr.mxu0 %v203
    %453 = vmatpush1.msra.mxu0 %v202
    %454 = vmatprep.subr.mxu0 %v205
    %455 = vmatpush1.msra.mxu0 %v204
    %456 = vmatprep.subr.mxu0 %v207
    %457 = vmatpush1.msra.mxu0 %v206
    %458 = vmatprep.subr.mxu0 %v209
    %459 = vmatpush1.msra.mxu0 %v208
    %460 = vmatprep.subr.mxu0 %v211
    %461 = vmatpush1.msra.mxu0 %v210
    %462 = vmatprep.subr.mxu0 %v213
    %463 = vmatpush1.msra.mxu0 %v212
    %464 = vmatprep.subr.mxu0 %v215
    %465 = vmatpush1.msra.mxu0 %v214
    %466 = vmatprep.subr.mxu0 0.0
    %467 = vmatpush1.msra.mxu0 0.0
    %468 = vmatprep.subr.mxu0 0.0
    %469 = vmatpush1.msra.mxu0 0.0
    %470 = vmatprep.subr.mxu0 0.0
    %471 = vmatpush1.msra.mxu0 0.0
    %472 = vmatprep.subr.mxu0 0.0
    %473 = vmatpush1.msra.mxu0 0.0
    %474 = vmatprep.subr.mxu0 0.0
    %475 = vmatpush1.msra.mxu0 0.0
    %476 = vmatprep.subr.mxu0 0.0
    %477 = vmatpush1.msra.mxu0 0.0
    %478 = vmatprep.subr.mxu0 0.0
    %479 = vmatpush1.msra.mxu0 0.0
    %480 = vmatprep.subr.mxu0 0.0
    %481 = vmatpush1.msra.mxu0 0.0
    %482 = vmatprep.subr.mxu0 0.0
    %483 = vmatpush1.msra.mxu0 0.0
    %484 = vmatprep.subr.mxu0 0.0
    %485 = vmatpush1.msra.mxu0 0.0
    %486 = vmatprep.subr.mxu0 0.0
    %487 = vmatpush1.msra.mxu0 0.0
    %488 = vmatprep.subr.mxu0 0.0
    %489 = vmatpush1.msra.mxu0 0.0
    %490 = vmatprep.subr.mxu0 0.0
    %491 = vmatpush1.msra.mxu0 0.0
    %492 = vmatprep.subr.mxu0 0.0
    %493 = vmatpush1.msra.mxu0 0.0
    %494 = vmatprep.subr.mxu0 0.0
    %495 = vmatpush1.msra.mxu0 0.0
    %496 = vmatprep.subr.mxu0 0.0
    %497 = vmatpush1.msra.mxu0 0.0
    %498 = vmatprep.subr.mxu0 0.0
    %499 = vmatpush1.msra.mxu0 0.0
    %500 = vmatprep.subr.mxu0 0.0
    %501 = vmatpush1.msra.mxu0 0.0
    %502 = vmatprep.subr.mxu0 0.0
    %503 = vmatpush1.msra.mxu0 0.0
    %504 = vmatprep.subr.mxu0 0.0
    %505 = vmatpush1.msra.mxu0 0.0
    %506 = vmatprep.subr.mxu0 0.0
    %507 = vmatpush1.msra.mxu0 0.0
    %508 = vmatprep.subr.mxu0 0.0
    %509 = vmatpush1.msra.mxu0 0.0
    %510 = vmatprep.subr.mxu0 0.0
    %511 = vmatpush1.msra.mxu0 0.0
    %512 = vmatprep.subr.mxu0 0.0
    %513 = vmatpush1.msra.mxu0 0.0
    %514 = vmatprep.mubr.f32.mxu0 0.0
    %515 = vmatmul.mubr.f32.gmra.mrb[0].mxu0 %v448
    %v516 = vpop.f32.mrb[0].mxu0
    %v517 = vadd.f32 0.0, %v516
    %v518 = vpop.f32.mrb[0].mxu0
    %v519 = vadd.f32 0.0, %v518
    %520 = vdwg.mxu0
    %v521 = vadd.f32 %v443, %v517
    %v522 = vxor.u32 %v521, 2147483648
    %v523 = vmul.f32 %v522, 1.442695
    %v524 = vpow.pop %v523
    %v525 = vadd.f32 %v524, 1.0
    %v526 = vrcp.pop %v525
    %v527 = vmul.f32 1.0, %v526
    %v528 = vadd.f32 %v519, %v304
    %v529 = vmul.f32 %v527, %v528
    %v530 = vadd.f32 %v444, %v529
    %v531 = vtanh.pop %v530
    %v532 = vsub.f32 1.0, %v527
    %534 = vrot.lane.b32.xlu0 %v531, 64
    %v535 = vpop.permute.xlu0 %534
    %v537 = vmul.f32 %v532, %v535
    %v539 = vmul.f32 %v527, %v445
    %v540 = vadd.f32 %v537, %v539
    %542 = vrot.lane.b32.xlu0 %v540, 64
    %v543 = vpop.permute.xlu0 %542
    %s545 = scalar_lea.vmem [#allocation3], 8
    %546 = vst.msk [vmem:[%s545] sm:$0xf] %vm322, %v543
    %547 = vrot.lane.b32.xlu0 %v540, 32
    %v548 = vpop.permute.xlu0 %547
    %s550 = scalar_lea.vmem [#allocation4], 20
    %551 = vst.msk [vmem:[%s550] sm:$0xf] %vm322, %v548
    %v552 = vld [vmem:[#allocation2 + $0x10] sm:$0xf0]
    %v553 = vld [vmem:[#allocation2 + $0x18] sm:$0xf0]
    %v554 = vsel %vm90, %v543, 0
    %556 = vmatprep.subr.mxu0 %v201
    %557 = vmatpush1.msra.mxu0 %v200
    %558 = vmatprep.subr.mxu0 %v203
    %559 = vmatpush1.msra.mxu0 %v202
    %560 = vmatprep.subr.mxu0 %v205
    %561 = vmatpush1.msra.mxu0 %v204
    %562 = vmatprep.subr.mxu0 %v207
    %563 = vmatpush1.msra.mxu0 %v206
    %564 = vmatprep.subr.mxu0 %v209
    %565 = vmatpush1.msra.mxu0 %v208
    %566 = vmatprep.subr.mxu0 %v211
    %567 = vmatpush1.msra.mxu0 %v210
    %568 = vmatprep.subr.mxu0 %v213
    %569 = vmatpush1.msra.mxu0 %v212
    %570 = vmatprep.subr.mxu0 %v215
    %571 = vmatpush1.msra.mxu0 %v214
    %572 = vmatprep.subr.mxu0 0.0
    %573 = vmatpush1.msra.mxu0 0.0
    %574 = vmatprep.subr.mxu0 0.0
    %575 = vmatpush1.msra.mxu0 0.0
    %576 = vmatprep.subr.mxu0 0.0
    %577 = vmatpush1.msra.mxu0 0.0
    %578 = vmatprep.subr.mxu0 0.0
    %579 = vmatpush1.msra.mxu0 0.0
    %580 = vmatprep.subr.mxu0 0.0
    %581 = vmatpush1.msra.mxu0 0.0
    %582 = vmatprep.subr.mxu0 0.0
    %583 = vmatpush1.msra.mxu0 0.0
    %584 = vmatprep.subr.mxu0 0.0
    %585 = vmatpush1.msra.mxu0 0.0
    %586 = vmatprep.subr.mxu0 0.0
    %587 = vmatpush1.msra.mxu0 0.0
    %588 = vmatprep.subr.mxu0 0.0
    %589 = vmatpush1.msra.mxu0 0.0
    %590 = vmatprep.subr.mxu0 0.0
    %591 = vmatpush1.msra.mxu0 0.0
    %592 = vmatprep.subr.mxu0 0.0
    %593 = vmatpush1.msra.mxu0 0.0
    %594 = vmatprep.subr.mxu0 0.0
    %595 = vmatpush1.msra.mxu0 0.0
    %596 = vmatprep.subr.mxu0 0.0
    %597 = vmatpush1.msra.mxu0 0.0
    %598 = vmatprep.subr.mxu0 0.0
    %599 = vmatpush1.msra.mxu0 0.0
    %600 = vmatprep.subr.mxu0 0.0
    %601 = vmatpush1.msra.mxu0 0.0
    %602 = vmatprep.subr.mxu0 0.0
    %603 = vmatpush1.msra.mxu0 0.0
    %604 = vmatprep.subr.mxu0 0.0
    %605 = vmatpush1.msra.mxu0 0.0
    %606 = vmatprep.subr.mxu0 0.0
    %607 = vmatpush1.msra.mxu0 0.0
    %608 = vmatprep.subr.mxu0 0.0
    %609 = vmatpush1.msra.mxu0 0.0
    %610 = vmatprep.subr.mxu0 0.0
    %611 = vmatpush1.msra.mxu0 0.0
    %612 = vmatprep.subr.mxu0 0.0
    %613 = vmatpush1.msra.mxu0 0.0
    %614 = vmatprep.subr.mxu0 0.0
    %615 = vmatpush1.msra.mxu0 0.0
    %616 = vmatprep.subr.mxu0 0.0
    %617 = vmatpush1.msra.mxu0 0.0
    %618 = vmatprep.subr.mxu0 0.0
    %619 = vmatpush1.msra.mxu0 0.0
    %620 = vmatprep.mubr.f32.mxu0 0.0
    %621 = vmatmul.mubr.f32.gmra.mrb[0].mxu0 %v554
    %v622 = vpop.f32.mrb[0].mxu0
    %v623 = vadd.f32 0.0, %v622
    %v624 = vpop.f32.mrb[0].mxu0
    %v625 = vadd.f32 0.0, %v624
    %626 = vdwg.mxu0
    %v628 = vrot.slane %v623, 4
    %v630 = vadd.f32 %v552, %v628
    %v631 = vxor.u32 %v630, 2147483648
    %v632 = vmul.f32 %v631, 1.442695
    %v633 = vpow.pop %v632
    %v634 = vadd.f32 %v633, 1.0
    %v635 = vrcp.pop %v634
    %v636 = vmul.f32 1.0, %v635
    %v637 = vadd.f32 %v625, %v304
    %v639 = vrot.slane %v637, 4
    %v641 = vmul.f32 %v636, %v639
    %v642 = vadd.f32 %v553, %v641
    %v643 = vtanh.pop %v642
    %v644 = vsub.f32 1.0, %v636
    %646 = vrot.lane.b32.xlu0 %v643, 64
    %v647 = vpop.permute.xlu0 %646
    %v649 = vmul.f32 %v644, %v647
    %v650 = vrot.slane %v540, 4
    %v652 = vmul.f32 %v636, %v650
    %v653 = vadd.f32 %v649, %v652
    %655 = vrot.lane.b32.xlu0 %v653, 64
    %v656 = vpop.permute.xlu0 %655
    %s658 = scalar_lea.vmem [#allocation3], 12
    %659 = vst.msk [vmem:[%s658 - $0x4] sm:$0xf0] %vm436, %v656
    %660 = vrot.lane.b32.xlu0 %v653, 32
    %v661 = vpop.permute.xlu0 %660
    %s663 = scalar_lea.vmem [#allocation4], 16
    %664 = vst.msk [vmem:[%s663 - $0x4] sm:$0xf0] %vm436, %v661
    %v665 = vld [vmem:[#allocation2 + $0x20] sm:$0xf]
    %v666 = vld [vmem:[#allocation2 + $0x28] sm:$0xf]
    %v667 = vrot.slane %v653, 4
    %668 = vrot.lane.b32.xlu0 %v667, 64
    %v669 = vpop.permute.xlu0 %668
    %v670 = vsel %vm90, %v669, 0
    %672 = vmatprep.subr.mxu0 %v201
    %673 = vmatpush1.msra.mxu0 %v200
    %674 = vmatprep.subr.mxu0 %v203
    %675 = vmatpush1.msra.mxu0 %v202
    %676 = vmatprep.subr.mxu0 %v205
    %677 = vmatpush1.msra.mxu0 %v204
    %678 = vmatprep.subr.mxu0 %v207
    %679 = vmatpush1.msra.mxu0 %v206
    %680 = vmatprep.subr.mxu0 %v209
    %681 = vmatpush1.msra.mxu0 %v208
    %682 = vmatprep.subr.mxu0 %v211
    %683 = vmatpush1.msra.mxu0 %v210
    %684 = vmatprep.subr.mxu0 %v213
    %685 = vmatpush1.msra.mxu0 %v212
    %686 = vmatprep.subr.mxu0 %v215
    %687 = vmatpush1.msra.mxu0 %v214
    %688 = vmatprep.subr.mxu0 0.0
    %689 = vmatpush1.msra.mxu0 0.0
    %690 = vmatprep.subr.mxu0 0.0
    %691 = vmatpush1.msra.mxu0 0.0
    %692 = vmatprep.subr.mxu0 0.0
    %693 = vmatpush1.msra.mxu0 0.0
    %694 = vmatprep.subr.mxu0 0.0
    %695 = vmatpush1.msra.mxu0 0.0
    %696 = vmatprep.subr.mxu0 0.0
    %697 = vmatpush1.msra.mxu0 0.0
    %698 = vmatprep.subr.mxu0 0.0
    %699 = vmatpush1.msra.mxu0 0.0
    %700 = vmatprep.subr.mxu0 0.0
    %701 = vmatpush1.msra.mxu0 0.0
    %702 = vmatprep.subr.mxu0 0.0
    %703 = vmatpush1.msra.mxu0 0.0
    %704 = vmatprep.subr.mxu0 0.0
    %705 = vmatpush1.msra.mxu0 0.0
    %706 = vmatprep.subr.mxu0 0.0
    %707 = vmatpush1.msra.mxu0 0.0
    %708 = vmatprep.subr.mxu0 0.0
    %709 = vmatpush1.msra.mxu0 0.0
    %710 = vmatprep.subr.mxu0 0.0
    %711 = vmatpush1.msra.mxu0 0.0
    %712 = vmatprep.subr.mxu0 0.0
    %713 = vmatpush1.msra.mxu0 0.0
    %714 = vmatprep.subr.mxu0 0.0
    %715 = vmatpush1.msra.mxu0 0.0
    %716 = vmatprep.subr.mxu0 0.0
    %717 = vmatpush1.msra.mxu0 0.0
    %718 = vmatprep.subr.mxu0 0.0
    %719 = vmatpush1.msra.mxu0 0.0
    %720 = vmatprep.subr.mxu0 0.0
    %721 = vmatpush1.msra.mxu0 0.0
    %722 = vmatprep.subr.mxu0 0.0
    %723 = vmatpush1.msra.mxu0 0.0
    %724 = vmatprep.subr.mxu0 0.0
    %725 = vmatpush1.msra.mxu0 0.0
    %726 = vmatprep.subr.mxu0 0.0
    %727 = vmatpush1.msra.mxu0 0.0
    %728 = vmatprep.subr.mxu0 0.0
    %729 = vmatpush1.msra.mxu0 0.0
    %730 = vmatprep.subr.mxu0 0.0
    %731 = vmatpush1.msra.mxu0 0.0
    %732 = vmatprep.subr.mxu0 0.0
    %733 = vmatpush1.msra.mxu0 0.0
    %734 = vmatprep.subr.mxu0 0.0
    %735 = vmatpush1.msra.mxu0 0.0
    %736 = vmatprep.mubr.f32.mxu0 0.0
    %737 = vmatmul.mubr.f32.gmra.mrb[0].mxu0 %v670
    %v738 = vpop.f32.mrb[0].mxu0
    %v739 = vadd.f32 0.0, %v738
    %v740 = vpop.f32.mrb[0].mxu0
    %v741 = vadd.f32 0.0, %v740
    %742 = vdwg.mxu0
    %v743 = vadd.f32 %v665, %v739
    %v744 = vxor.u32 %v743, 2147483648
    %v745 = vmul.f32 %v744, 1.442695
    %v746 = vpow.pop %v745
    %v747 = vadd.f32 %v746, 1.0
    %v748 = vrcp.pop %v747
    %v749 = vmul.f32 1.0, %v748
    %v750 = vadd.f32 %v741, %v304
    %v751 = vmul.f32 %v749, %v750
    %v752 = vadd.f32 %v666, %v751
    %v753 = vtanh.pop %v752
    %v754 = vsub.f32 1.0, %v749
    %756 = vrot.lane.b32.xlu0 %v753, 64
    %v757 = vpop.permute.xlu0 %756
    %v759 = vmul.f32 %v754, %v757
    %v761 = vmul.f32 %v749, %v667
    %v762 = vadd.f32 %v759, %v761
    %764 = vrot.lane.b32.xlu0 %v762, 64
    %v765 = vpop.permute.xlu0 %764
    %s767 = scalar_lea.vmem [#allocation3], 16
    %768 = vst.msk [vmem:[%s767] sm:$0xf] %vm322, %v765
    %769 = vrot.lane.b32.xlu0 %v762, 32
    %v770 = vpop.permute.xlu0 %769
    %s772 = scalar_lea.vmem [#allocation4], 12
    %773 = vst.msk [vmem:[%s772] sm:$0xf] %vm322, %v770
    %v774 = vld [vmem:[#allocation2 + $0x20] sm:$0xf0]
    %v775 = vld [vmem:[#allocation2 + $0x28] sm:$0xf0]
    %v776 = vsel %vm90, %v765, 0
    %778 = vmatprep.subr.mxu0 %v201
    %779 = vmatpush1.msra.mxu0 %v200
    %780 = vmatprep.subr.mxu0 %v203
    %781 = vmatpush1.msra.mxu0 %v202
    %782 = vmatprep.subr.mxu0 %v205
    %783 = vmatpush1.msra.mxu0 %v204
    %784 = vmatprep.subr.mxu0 %v207
    %785 = vmatpush1.msra.mxu0 %v206
    %786 = vmatprep.subr.mxu0 %v209
    %787 = vmatpush1.msra.mxu0 %v208
    %788 = vmatprep.subr.mxu0 %v211
    %789 = vmatpush1.msra.mxu0 %v210
    %790 = vmatprep.subr.mxu0 %v213
    %791 = vmatpush1.msra.mxu0 %v212
    %792 = vmatprep.subr.mxu0 %v215
    %793 = vmatpush1.msra.mxu0 %v214
    %794 = vmatprep.subr.mxu0 0.0
    %795 = vmatpush1.msra.mxu0 0.0
    %796 = vmatprep.subr.mxu0 0.0
    %797 = vmatpush1.msra.mxu0 0.0
    %798 = vmatprep.subr.mxu0 0.0
    %799 = vmatpush1.msra.mxu0 0.0
    %800 = vmatprep.subr.mxu0 0.0
    %801 = vmatpush1.msra.mxu0 0.0
    %802 = vmatprep.subr.mxu0 0.0
    %803 = vmatpush1.msra.mxu0 0.0
    %804 = vmatprep.subr.mxu0 0.0
    %805 = vmatpush1.msra.mxu0 0.0
    %806 = vmatprep.subr.mxu0 0.0
    %807 = vmatpush1.msra.mxu0 0.0
    %808 = vmatprep.subr.mxu0 0.0
    %809 = vmatpush1.msra.mxu0 0.0
    %810 = vmatprep.subr.mxu0 0.0
    %811 = vmatpush1.msra.mxu0 0.0
    %812 = vmatprep.subr.mxu0 0.0
    %813 = vmatpush1.msra.mxu0 0.0
    %814 = vmatprep.subr.mxu0 0.0
    %815 = vmatpush1.msra.mxu0 0.0
    %816 = vmatprep.subr.mxu0 0.0
    %817 = vmatpush1.msra.mxu0 0.0
    %818 = vmatprep.subr.mxu0 0.0
    %819 = vmatpush1.msra.mxu0 0.0
    %820 = vmatprep.subr.mxu0 0.0
    %821 = vmatpush1.msra.mxu0 0.0
    %822 = vmatprep.subr.mxu0 0.0
    %823 = vmatpush1.msra.mxu0 0.0
    %824 = vmatprep.subr.mxu0 0.0
    %825 = vmatpush1.msra.mxu0 0.0
    %826 = vmatprep.subr.mxu0 0.0
    %827 = vmatpush1.msra.mxu0 0.0
    %828 = vmatprep.subr.mxu0 0.0
    %829 = vmatpush1.msra.mxu0 0.0
    %830 = vmatprep.subr.mxu0 0.0
    %831 = vmatpush1.msra.mxu0 0.0
    %832 = vmatprep.subr.mxu0 0.0
    %833 = vmatpush1.msra.mxu0 0.0
    %834 = vmatprep.subr.mxu0 0.0
    %835 = vmatpush1.msra.mxu0 0.0
    %836 = vmatprep.subr.mxu0 0.0
    %837 = vmatpush1.msra.mxu0 0.0
    %838 = vmatprep.subr.mxu0 0.0
    %839 = vmatpush1.msra.mxu0 0.0
    %840 = vmatprep.subr.mxu0 0.0
    %841 = vmatpush1.msra.mxu0 0.0
    %842 = vmatprep.mubr.f32.mxu0 0.0
    %843 = vmatmul.mubr.f32.gmra.mrb[0].mxu0 %v776
    %v844 = vpop.f32.mrb[0].mxu0
    %v845 = vadd.f32 0.0, %v844
    %v846 = vpop.f32.mrb[0].mxu0
    %v847 = vadd.f32 0.0, %v846
    %848 = vdwg.mxu0
    %v850 = vrot.slane %v845, 4
    %v852 = vadd.f32 %v774, %v850
    %v853 = vxor.u32 %v852, 2147483648
    %v854 = vmul.f32 %v853, 1.442695
    %v855 = vpow.pop %v854
    %v856 = vadd.f32 %v855, 1.0
    %v857 = vrcp.pop %v856
    %v858 = vmul.f32 1.0, %v857
    %v859 = vadd.f32 %v847, %v304
    %v861 = vrot.slane %v859, 4
    %v863 = vmul.f32 %v858, %v861
    %v864 = vadd.f32 %v775, %v863
    %v865 = vtanh.pop %v864
    %v866 = vsub.f32 1.0, %v858
    %868 = vrot.lane.b32.xlu0 %v865, 64
    %v869 = vpop.permute.xlu0 %868
    %v871 = vmul.f32 %v866, %v869
    %v872 = vrot.slane %v762, 4
    %v874 = vmul.f32 %v858, %v872
    %v875 = vadd.f32 %v871, %v874
    %877 = vrot.lane.b32.xlu0 %v875, 64
    %v878 = vpop.permute.xlu0 %877
    %s880 = scalar_lea.vmem [#allocation3], 20
    %881 = vst.msk [vmem:[%s880 - $0x4] sm:$0xf0] %vm436, %v878
    %882 = vrot.lane.b32.xlu0 %v875, 32
    %v883 = vpop.permute.xlu0 %882
    %s885 = scalar_lea.vmem [#allocation4], 8
    %886 = vst.msk [vmem:[%s885 - $0x4] sm:$0xf0] %vm436, %v883
    %v887 = vld [vmem:[#allocation2 + $0x30] sm:$0xf]
    %v888 = vld [vmem:[#allocation2 + $0x38] sm:$0xf]
    %v889 = vrot.slane %v875, 4
    %890 = vrot.lane.b32.xlu0 %v889, 64
    %v891 = vpop.permute.xlu0 %890
    %v892 = vsel %vm90, %v891, 0
    %894 = vmatprep.subr.mxu0 %v201
    %895 = vmatpush1.msra.mxu0 %v200
    %896 = vmatprep.subr.mxu0 %v203
    %897 = vmatpush1.msra.mxu0 %v202
    %898 = vmatprep.subr.mxu0 %v205
    %899 = vmatpush1.msra.mxu0 %v204
    %900 = vmatprep.subr.mxu0 %v207
    %901 = vmatpush1.msra.mxu0 %v206
    %902 = vmatprep.subr.mxu0 %v209
    %903 = vmatpush1.msra.mxu0 %v208
    %904 = vmatprep.subr.mxu0 %v211
    %905 = vmatpush1.msra.mxu0 %v210
    %906 = vmatprep.subr.mxu0 %v213
    %907 = vmatpush1.msra.mxu0 %v212
    %908 = vmatprep.subr.mxu0 %v215
    %909 = vmatpush1.msra.mxu0 %v214
    %910 = vmatprep.subr.mxu0 0.0
    %911 = vmatpush1.msra.mxu0 0.0
    %912 = vmatprep.subr.mxu0 0.0
    %913 = vmatpush1.msra.mxu0 0.0
    %914 = vmatprep.subr.mxu0 0.0
    %915 = vmatpush1.msra.mxu0 0.0
    %916 = vmatprep.subr.mxu0 0.0
    %917 = vmatpush1.msra.mxu0 0.0
    %918 = vmatprep.subr.mxu0 0.0
    %919 = vmatpush1.msra.mxu0 0.0
    %920 = vmatprep.subr.mxu0 0.0
    %921 = vmatpush1.msra.mxu0 0.0
    %922 = vmatprep.subr.mxu0 0.0
    %923 = vmatpush1.msra.mxu0 0.0
    %924 = vmatprep.subr.mxu0 0.0
    %925 = vmatpush1.msra.mxu0 0.0
    %926 = vmatprep.subr.mxu0 0.0
    %927 = vmatpush1.msra.mxu0 0.0
    %928 = vmatprep.subr.mxu0 0.0
    %929 = vmatpush1.msra.mxu0 0.0
    %930 = vmatprep.subr.mxu0 0.0
    %931 = vmatpush1.msra.mxu0 0.0
    %932 = vmatprep.subr.mxu0 0.0
    %933 = vmatpush1.msra.mxu0 0.0
    %934 = vmatprep.subr.mxu0 0.0
    %935 = vmatpush1.msra.mxu0 0.0
    %936 = vmatprep.subr.mxu0 0.0
    %937 = vmatpush1.msra.mxu0 0.0
    %938 = vmatprep.subr.mxu0 0.0
    %939 = vmatpush1.msra.mxu0 0.0
    %940 = vmatprep.subr.mxu0 0.0
    %941 = vmatpush1.msra.mxu0 0.0
    %942 = vmatprep.subr.mxu0 0.0
    %943 = vmatpush1.msra.mxu0 0.0
    %944 = vmatprep.subr.mxu0 0.0
    %945 = vmatpush1.msra.mxu0 0.0
    %946 = vmatprep.subr.mxu0 0.0
    %947 = vmatpush1.msra.mxu0 0.0
    %948 = vmatprep.subr.mxu0 0.0
    %949 = vmatpush1.msra.mxu0 0.0
    %950 = vmatprep.subr.mxu0 0.0
    %951 = vmatpush1.msra.mxu0 0.0
    %952 = vmatprep.subr.mxu0 0.0
    %953 = vmatpush1.msra.mxu0 0.0
    %954 = vmatprep.subr.mxu0 0.0
    %955 = vmatpush1.msra.mxu0 0.0
    %956 = vmatprep.subr.mxu0 0.0
    %957 = vmatpush1.msra.mxu0 0.0
    %958 = vmatprep.mubr.f32.mxu0 0.0
    %959 = vmatmul.mubr.f32.gmra.mrb[0].mxu0 %v892
    %v960 = vpop.f32.mrb[0].mxu0
    %v961 = vadd.f32 0.0, %v960
    %v962 = vpop.f32.mrb[0].mxu0
    %v963 = vadd.f32 0.0, %v962
    %964 = vdwg.mxu0
    %v965 = vadd.f32 %v887, %v961
    %v966 = vxor.u32 %v965, 2147483648
    %v967 = vmul.f32 %v966, 1.442695
    %v968 = vpow.pop %v967
    %v969 = vadd.f32 %v968, 1.0
    %v970 = vrcp.pop %v969
    %v971 = vmul.f32 1.0, %v970
    %v972 = vadd.f32 %v963, %v304
    %v973 = vmul.f32 %v971, %v972
    %v974 = vadd.f32 %v888, %v973
    %v975 = vtanh.pop %v974
    %v976 = vsub.f32 1.0, %v971
    %978 = vrot.lane.b32.xlu0 %v975, 64
    %v979 = vpop.permute.xlu0 %978
    %v981 = vmul.f32 %v976, %v979
    %v983 = vmul.f32 %v971, %v889
    %v984 = vadd.f32 %v981, %v983
    %986 = vrot.lane.b32.xlu0 %v984, 64
    %v987 = vpop.permute.xlu0 %986
    %s989 = scalar_lea.vmem [#allocation3], 24
    %990 = vst.msk [vmem:[%s989] sm:$0xf] %vm322, %v987
    %991 = vrot.lane.b32.xlu0 %v984, 32
    %v992 = vpop.permute.xlu0 %991
    %s994 = scalar_lea.vmem [#allocation4], 4
    %995 = vst.msk [vmem:[%s994] sm:$0xf] %vm322, %v992
    %v996 = vld [vmem:[#allocation2 + $0x30] sm:$0xf0]
    %v997 = vld [vmem:[#allocation2 + $0x38] sm:$0xf0]
    %v998 = vsel %vm90, %v987, 0
    %1000 = vmatprep.subr.mxu0 %v201
    %1001 = vmatpush1.msra.mxu0 %v200
    %1002 = vmatprep.subr.mxu0 %v203
    %1003 = vmatpush1.msra.mxu0 %v202
    %1004 = vmatprep.subr.mxu0 %v205
    %1005 = vmatpush1.msra.mxu0 %v204
    %1006 = vmatprep.subr.mxu0 %v207
    %1007 = vmatpush1.msra.mxu0 %v206
    %1008 = vmatprep.subr.mxu0 %v209
    %1009 = vmatpush1.msra.mxu0 %v208
    %1010 = vmatprep.subr.mxu0 %v211
    %1011 = vmatpush1.msra.mxu0 %v210
    %1012 = vmatprep.subr.mxu0 %v213
    %1013 = vmatpush1.msra.mxu0 %v212
    %1014 = vmatprep.subr.mxu0 %v215
    %1015 = vmatpush1.msra.mxu0 %v214
    %1016 = vmatprep.subr.mxu0 0.0
    %1017 = vmatpush1.msra.mxu0 0.0
    %1018 = vmatprep.subr.mxu0 0.0
    %1019 = vmatpush1.msra.mxu0 0.0
    %1020 = vmatprep.subr.mxu0 0.0
    %1021 = vmatpush1.msra.mxu0 0.0
    %1022 = vmatprep.subr.mxu0 0.0
    %1023 = vmatpush1.msra.mxu0 0.0
    %1024 = vmatprep.subr.mxu0 0.0
    %1025 = vmatpush1.msra.mxu0 0.0
    %1026 = vmatprep.subr.mxu0 0.0
    %1027 = vmatpush1.msra.mxu0 0.0
    %1028 = vmatprep.subr.mxu0 0.0
    %1029 = vmatpush1.msra.mxu0 0.0
    %1030 = vmatprep.subr.mxu0 0.0
    %1031 = vmatpush1.msra.mxu0 0.0
    %1032 = vmatprep.subr.mxu0 0.0
    %1033 = vmatpush1.msra.mxu0 0.0
    %1034 = vmatprep.subr.mxu0 0.0
    %1035 = vmatpush1.msra.mxu0 0.0
    %1036 = vmatprep.subr.mxu0 0.0
    %1037 = vmatpush1.msra.mxu0 0.0
    %1038 = vmatprep.subr.mxu0 0.0
    %1039 = vmatpush1.msra.mxu0 0.0
    %1040 = vmatprep.subr.mxu0 0.0
    %1041 = vmatpush1.msra.mxu0 0.0
    %1042 = vmatprep.subr.mxu0 0.0
    %1043 = vmatpush1.msra.mxu0 0.0
    %1044 = vmatprep.subr.mxu0 0.0
    %1045 = vmatpush1.msra.mxu0 0.0
    %1046 = vmatprep.subr.mxu0 0.0
    %1047 = vmatpush1.msra.mxu0 0.0
    %1048 = vmatprep.subr.mxu0 0.0
    %1049 = vmatpush1.msra.mxu0 0.0
    %1050 = vmatprep.subr.mxu0 0.0
    %1051 = vmatpush1.msra.mxu0 0.0
    %1052 = vmatprep.subr.mxu0 0.0
    %1053 = vmatpush1.msra.mxu0 0.0
    %1054 = vmatprep.subr.mxu0 0.0
    %1055 = vmatpush1.msra.mxu0 0.0
    %1056 = vmatprep.subr.mxu0 0.0
    %1057 = vmatpush1.msra.mxu0 0.0
    %1058 = vmatprep.subr.mxu0 0.0
    %1059 = vmatpush1.msra.mxu0 0.0
    %1060 = vmatprep.subr.mxu0 0.0
    %1061 = vmatpush1.msra.mxu0 0.0
    %1062 = vmatprep.subr.mxu0 0.0
    %1063 = vmatpush1.msra.mxu0 0.0
    %1064 = vmatprep.mubr.f32.mxu0 0.0
    %1065 = vmatmul.mubr.f32.gmra.mrb[0].mxu0 %v998
    %v1066 = vpop.f32.mrb[0].mxu0
    %v1067 = vadd.f32 0.0, %v1066
    %v1068 = vpop.f32.mrb[0].mxu0
    %v1069 = vadd.f32 0.0, %v1068
    %1070 = vdwg.mxu0
    %v1072 = vrot.slane %v1067, 4
    %v1074 = vadd.f32 %v996, %v1072
    %v1075 = vxor.u32 %v1074, 2147483648
    %v1076 = vmul.f32 %v1075, 1.442695
    %v1077 = vpow.pop %v1076
    %v1078 = vadd.f32 %v1077, 1.0
    %v1079 = vrcp.pop %v1078
    %v1080 = vmul.f32 1.0, %v1079
    %v1081 = vadd.f32 %v1069, %v304
    %v1083 = vrot.slane %v1081, 4
    %v1085 = vmul.f32 %v1080, %v1083
    %v1086 = vadd.f32 %v997, %v1085
    %v1087 = vtanh.pop %v1086
    %v1088 = vsub.f32 1.0, %v1080
    %1090 = vrot.lane.b32.xlu0 %v1087, 64
    %v1091 = vpop.permute.xlu0 %1090
    %v1093 = vmul.f32 %v1088, %v1091
    %v1094 = vrot.slane %v984, 4
    %v1096 = vmul.f32 %v1080, %v1094
    %v1097 = vadd.f32 %v1093, %v1096
    %1099 = vrot.lane.b32.xlu0 %v1097, 64
    %v1100 = vpop.permute.xlu0 %1099
    %s1102 = scalar_lea.vmem [#allocation3], 28
    %1103 = vst.msk [vmem:[%s1102 - $0x4] sm:$0xf0] %vm436, %v1100
    %1104 = vrot.lane.b32.xlu0 %v1097, 32
    %v1105 = vpop.permute.xlu0 %1104
    %1107 = vst.msk [vmem:[#allocation4 - $0x4] sm:$0xf0] %vm436, %v1105
    %v1108 = vld [vmem:[#allocation3] sm:$0xf]
    %v1109 = vld [vmem:[#allocation3 + $0x4] sm:$0xf]
    %v1110 = vld [vmem:[#allocation3 + $0x8] sm:$0xf]
    %v1111 = vld [vmem:[#allocation3 + $0xc] sm:$0xf]
    %v1112 = vld [vmem:[#allocation3 + $0x10] sm:$0xf]
    %v1113 = vld [vmem:[#allocation3 + $0x14] sm:$0xf]
    %v1114 = vld [vmem:[#allocation3 + $0x18] sm:$0xf]
    %v1115 = vld [vmem:[#allocation3 + $0x1c] sm:$0xf]
    %v1116 = vld [vmem:[#allocation4] sm:$0xf]
    %v1117 = vld [vmem:[#allocation4 + $0x4] sm:$0xf]
    %v1118 = vld [vmem:[#allocation4 + $0x8] sm:$0xf]
    %v1119 = vld [vmem:[#allocation4 + $0xc] sm:$0xf]
    %v1120 = vld [vmem:[#allocation4 + $0x10] sm:$0xf]
    %v1121 = vld [vmem:[#allocation4 + $0x14] sm:$0xf]
    %v1122 = vld [vmem:[#allocation4 + $0x18] sm:$0xf]
    %v1123 = vld [vmem:[#allocation4 + $0x1c] sm:$0xf]
    %1132 = vrot.lane.b32.xlu0 %v1116, 32
    %v1133 = vpop.permute.xlu0 %1132
    %1134 = vrot.lane.b32.xlu0 %v1117, 32
    %v1135 = vpop.permute.xlu0 %1134
    %1136 = vrot.lane.b32.xlu0 %v1118, 32
    %v1137 = vpop.permute.xlu0 %1136
    %1138 = vrot.lane.b32.xlu0 %v1119, 32
    %v1139 = vpop.permute.xlu0 %1138
    %1140 = vrot.lane.b32.xlu0 %v1120, 32
    %v1141 = vpop.permute.xlu0 %1140
    %1142 = vrot.lane.b32.xlu0 %v1121, 32
    %v1143 = vpop.permute.xlu0 %1142
    %1144 = vrot.lane.b32.xlu0 %v1122, 32
    %v1145 = vpop.permute.xlu0 %1144
    %1146 = vrot.lane.b32.xlu0 %v1123, 32
    %v1147 = vpop.permute.xlu0 %1146
    %vm1156 = vcmask 261120
    %v1157 = vsel %vm1156, %v1108, %v1133
    %v1158 = vsel %vm1156, %v1109, %v1135
    %v1159 = vsel %vm1156, %v1110, %v1137
    %v1160 = vsel %vm1156, %v1111, %v1139
    %v1161 = vsel %vm1156, %v1112, %v1141
    %v1162 = vsel %vm1156, %v1113, %v1143
    %v1163 = vsel %vm1156, %v1114, %v1145
    %v1164 = vsel %vm1156, %v1115, %v1147
    %vm1165 = vcmask 519168
    %1166 = vst.msk [vmem:[#allocation10] sm:$0xf] %vm1165, %v1157
    %1167 = vst.msk [vmem:[#allocation10 + $0x4] sm:$0xf] %vm1165, %v1158
    %1168 = vst.msk [vmem:[#allocation10 + $0x8] sm:$0xf] %vm1165, %v1159
    %1169 = vst.msk [vmem:[#allocation10 + $0xc] sm:$0xf] %vm1165, %v1160
    %1170 = vst.msk [vmem:[#allocation10 + $0x10] sm:$0xf] %vm1165, %v1161
    %1171 = vst.msk [vmem:[#allocation10 + $0x14] sm:$0xf] %vm1165, %v1162
    %1172 = vst.msk [vmem:[#allocation10 + $0x18] sm:$0xf] %vm1165, %v1163
    %1173 = vst.msk [vmem:[#allocation10 + $0x1c] sm:$0xf] %vm1165, %v1164
    %v1174 = vld [vmem:[%s5] sm:$0xff]
    %v1175 = vld [vmem:[%s5 + $0x8] sm:$0xff]
    %v1176 = vld [vmem:[%s5 + $0x10] sm:$0xff]
    %v1177 = vld [vmem:[%s5 + $0x18] sm:$0xff]
    %v1178 = vld [vmem:[%s5 + $0x20] sm:$0xff]
    %v1179 = vld [vmem:[%s5 + $0x28] sm:$0xff]
    %v1180 = vld [vmem:[%s5 + $0x30] sm:$0xff]
    %v1181 = vld [vmem:[%s5 + $0x38] sm:$0xff]
    %v1182 = vld [vmem:[%s6] sm:$0x1]
    %v1184 = vlaneseq
    %v1185 = vshrl.u32 %v1184, 7
    %v1186 = vsub.s32 0, %v1185
    %v1187 = vrot.slane %v1182, %v1186
    %v1189 = vrot.slane %v1097, 4
    %1190 = vrot.lane.b32.xlu0 %v1189, 64
    %v1191 = vpop.permute.xlu0 %1190
    %v1192 = vsel %vm90, %v1191, 0
    %1194 = vmatprep.subr.mxu0 0.0
    %1195 = vmatpush1.msra.mxu0 %v1174
    %1196 = vmatprep.subr.mxu0 0.0
    %1197 = vmatpush1.msra.mxu0 %v1175
    %1198 = vmatprep.subr.mxu0 0.0
    %1199 = vmatpush1.msra.mxu0 %v1176
    %1200 = vmatprep.subr.mxu0 0.0
    %1201 = vmatpush1.msra.mxu0 %v1177
    %1202 = vmatprep.subr.mxu0 0.0
    %1203 = vmatpush1.msra.mxu0 %v1178
    %1204 = vmatprep.subr.mxu0 0.0
    %1205 = vmatpush1.msra.mxu0 %v1179
    %1206 = vmatprep.subr.mxu0 0.0
    %1207 = vmatpush1.msra.mxu0 %v1180
    %1208 = vmatprep.subr.mxu0 0.0
    %1209 = vmatpush1.msra.mxu0 %v1181
    %1210 = vmatprep.subr.mxu0 0.0
    %1211 = vmatpush1.msra.mxu0 0.0
    %1212 = vmatprep.subr.mxu0 0.0
    %1213 = vmatpush1.msra.mxu0 0.0
    %1214 = vmatprep.subr.mxu0 0.0
    %1215 = vmatpush1.msra.mxu0 0.0
    %1216 = vmatprep.subr.mxu0 0.0
    %1217 = vmatpush1.msra.mxu0 0.0
    %1218 = vmatprep.subr.mxu0 0.0
    %1219 = vmatpush1.msra.mxu0 0.0
    %1220 = vmatprep.subr.mxu0 0.0
    %1221 = vmatpush1.msra.mxu0 0.0
    %1222 = vmatprep.subr.mxu0 0.0
    %1223 = vmatpush1.msra.mxu0 0.0
    %1224 = vmatprep.subr.mxu0 0.0
    %1225 = vmatpush1.msra.mxu0 0.0
    %1226 = vmatprep.subr.mxu0 0.0
    %1227 = vmatpush1.msra.mxu0 0.0
    %1228 = vmatprep.subr.mxu0 0.0
    %1229 = vmatpush1.msra.mxu0 0.0
    %1230 = vmatprep.subr.mxu0 0.0
    %1231 = vmatpush1.msra.mxu0 0.0
    %1232 = vmatprep.subr.mxu0 0.0
    %1233 = vmatpush1.msra.mxu0 0.0
    %1234 = vmatprep.subr.mxu0 0.0
    %1235 = vmatpush1.msra.mxu0 0.0
    %1236 = vmatprep.subr.mxu0 0.0
    %1237 = vmatpush1.msra.mxu0 0.0
    %1238 = vmatprep.subr.mxu0 0.0
    %1239 = vmatpush1.msra.mxu0 0.0
    %1240 = vmatprep.subr.mxu0 0.0
    %1241 = vmatpush1.msra.mxu0 0.0
    %1242 = vmatprep.subr.mxu0 0.0
    %1243 = vmatpush1.msra.mxu0 0.0
    %1244 = vmatprep.subr.mxu0 0.0
    %1245 = vmatpush1.msra.mxu0 0.0
    %1246 = vmatprep.subr.mxu0 0.0
    %1247 = vmatpush1.msra.mxu0 0.0
    %1248 = vmatprep.subr.mxu0 0.0
    %1249 = vmatpush1.msra.mxu0 0.0
    %1250 = vmatprep.subr.mxu0 0.0
    %1251 = vmatpush1.msra.mxu0 0.0
    %1252 = vmatprep.subr.mxu0 0.0
    %1253 = vmatpush1.msra.mxu0 0.0
    %1254 = vmatprep.subr.mxu0 0.0
    %1255 = vmatpush1.msra.mxu0 0.0
    %1256 = vmatprep.subr.mxu0 0.0
    %1257 = vmatpush1.msra.mxu0 0.0
    %1258 = vmatprep.mubr.f32.mxu0 0.0
    %1259 = vmatmul.mubr.f32.gmra.mrb[0].mxu0 %v1192
    %v1260 = vpop.f32.mrb[0].mxu0
    %v1261 = vadd.f32 %v1187, %v1260
    %v1262 = vpop.f32.mrb[0].mxu0
    %1263 = vdwg.mxu0
    %v1264 = vtanh.pop %v1261
    %1265 = vst.msk [vmem:[#allocation11] sm:$0xf] %vm322, %v1264
    // Predicated region
    $region38: #{tpu_custom_call.1} parent=1 // pred_check
      _
    $region39: #{tpu_custom_call.1} parent=1 // pred_check_branch
      %1267 = sbr.rel (0) target = $region41
    $region40: #{tpu_custom_call.1} parent=1 // pred_region
      %s1269 = ssub.s32 512, 512
      %1270 = vsyncadd [#allocation7], %s1269
      %s1271 = sshll.u32 [#allocation10], 4
      %s1272 = int_to_ptr.vmem [resolvable:$true] %s1271
      %1277 = dma.vmem_to_hbm [thread:$0]  %s1272, 512, %s7, [#allocation7], 64, 64, 4
    $region41: #{tpu_custom_call.1} parent=1 // pred_fallthru
      _
    // Predicated region
    $region42: #{tpu_custom_call.1} parent=1 // pred_check
      _
    $region43: #{tpu_custom_call.1} parent=1 // pred_check_branch
      %1279 = sbr.rel (0) target = $region45
    $region44: #{tpu_custom_call.1} parent=1 // pred_region
      %s1281 = ssub.s32 64, 64
      %1282 = vsyncadd [#allocation12], %s1281
      %s1284 = sshll.u32 [#allocation11], 4
      %s1285 = int_to_ptr.vmem [resolvable:$true] %s1284
      %1287 = dma.vmem_to_hbm [thread:$0]  %s1285, 64, %s8, [#allocation12]
    $region45: #{tpu_custom_call.1} parent=1 // pred_fallthru
      _
    // Predicated region
    $region46: #{tpu_custom_call.1} parent=1 // pred_check
      _
    $region47: #{tpu_custom_call.1} parent=1 // pred_check_branch
      %1289 = sbr.rel (0) target = $region49
    $region48: #{tpu_custom_call.1} parent=1 // pred_region
      %1290 = dma.done [#allocation7], 512
    $region49: #{tpu_custom_call.1} parent=1 // pred_fallthru
      _
    // Predicated region
    $region50: #{tpu_custom_call.1} parent=1 // pred_check
      _
    $region51: #{tpu_custom_call.1} parent=1 // pred_check_branch
      %1292 = sbr.rel (0) target = $region53
    $region52: #{tpu_custom_call.1} parent=1 // pred_region
      %1293 = dma.done [#allocation12], 64
    $region53: #{tpu_custom_call.1} parent=1 // pred_fallthru
      _
    %1294 = vsyncpa [#allocation6], 1
    %1295 = vsyncpa [#allocation9], 1
    %1296 = vsyncpa [#allocation7], 1
    %1297 = vsyncpa [#allocation12], 1

</llo_original>
